<compile_context>
chip_gen: v7x
topology: tpu7x:2x2x1
jax: 0.10.0
libtpu: 0.0.40
codegen_flags: <defaults>
</compile_context>

<pallas_src>
import functools

import jax
import jax.numpy as jnp
from jax import lax
from jax.experimental import pallas as pl
from jax.experimental.pallas import tpu as pltpu


# --------------------------------------------------------------------------------------
# Kernel A: fused QKV projection (+bias) + interleaved RoPE.  Grid: (batch, seq-tile).
# Q/K weight columns are pre-permuted per head to [even | odd] so RoPE is contiguous
# half-slab math; Q is pre-scaled by head_dim**-0.5 via the weights.
# --------------------------------------------------------------------------------------
def qkv_rope_kernel(x_ref, wqkv_ref, bqkv_ref, cos_ref, sin_ref,
                    q_ref, k_ref, v_ref, *, n_heads, head_dim):
    D = n_heads * head_dim
    hd2 = head_dim // 2

    xb = x_ref[0].astype(jnp.bfloat16)                          # (ts, D) bf16 for the MXU
    qkv = jnp.dot(xb, wqkv_ref[...],
                  preferred_element_type=jnp.float32) + bqkv_ref[...]   # (ts, 3D) f32

    q = qkv[:, :D]
    k = qkv[:, D:2 * D]
    v_ref[0] = qkv[:, 2 * D:].astype(v_ref.dtype)

    cos = cos_ref[...]                                          # (ts, hd/2) f32
    sin = sin_ref[...]

    for h in range(n_heads):                                    # small static unroll
        lo = h * head_dim
        mid = lo + hd2
        hi = lo + head_dim
        q_re, q_im = q[:, lo:mid], q[:, mid:hi]
        k_re, k_im = k[:, lo:mid], k[:, mid:hi]
        q_ref[0, :, lo:mid] = (q_re * cos - q_im * sin).astype(q_ref.dtype)
        q_ref[0, :, mid:hi] = (q_im * cos + q_re * sin).astype(q_ref.dtype)
        k_ref[0, :, lo:mid] = (k_re * cos - k_im * sin).astype(k_ref.dtype)
        k_ref[0, :, mid:hi] = (k_im * cos + k_re * sin).astype(k_ref.dtype)


# --------------------------------------------------------------------------------------
# Kernel B: flash-style causal attention + output projection.
# Grid: (batch, q-block, kv-block), kv innermost ("arbitrary").  Online-softmax state
# (m, l, acc) lives in VMEM scratch; the output block is written only on the last kv step
# via a single full-D projection matmul of the concat slab.
# --------------------------------------------------------------------------------------
def flash_attn_kernel(q_ref, k_ref, v_ref, wo_ref, bo_ref, o_ref,
                      acc_ref, m_ref, l_ref, slab_ref, *, n_heads, head_dim):
    tq = q_ref.shape[1]
    tk = k_ref.shape[1]
    qi = pl.program_id(1)
    ki = pl.program_id(2)
    nkv = pl.num_programs(2)

    q_start = qi * tq
    k_start = ki * tk
    neg_big = jnp.float32(-1e30)

    @pl.when(ki == 0)
    def _init():
        m_ref[...] = jnp.full_like(m_ref, neg_big)
        l_ref[...] = jnp.zeros_like(l_ref)
        acc_ref[...] = jnp.zeros_like(acc_ref)

    # Causal block skip: this key block matters only if its first key index is <= the
    # last query row of this query block.
    @pl.when(k_start <= q_start + tq - 1)
    def _compute():
        qb = q_ref[0]                                           # (tq, D) bf16 (pre-scaled)
        kb = k_ref[0]                                           # (tk, D) bf16
        vb = v_ref[0]                                           # (tk, D) bf16

        row = q_start + lax.broadcasted_iota(jnp.int32, (tq, tk), 0)
        col = k_start + lax.broadcasted_iota(jnp.int32, (tq, tk), 1)
        causal = row >= col
        trans_b = (((1,), (1,)), ((), ()))                      # q @ k^T without transpose

        for h in range(n_heads):                                # static unroll; state in VMEM
            lo = h * head_dim
            hi = lo + head_dim

            s = lax.dot_general(qb[:, lo:hi], kb[:, lo:hi], trans_b,
                                preferred_element_type=jnp.float32)      # (tq, tk) f32
            s = jnp.where(causal, s, neg_big)

            m_prev = m_ref[h]                                   # (tq, 1)
            m_new = jnp.maximum(m_prev, jnp.max(s, axis=-1, keepdims=True))
            alpha = jnp.exp(m_prev - m_new)
            p = jnp.exp(s - m_new)

            l_ref[h] = alpha * l_ref[h] + jnp.sum(p, axis=-1, keepdims=True)
            pv = jnp.dot(p.astype(jnp.bfloat16), vb[:, lo:hi],
                         preferred_element_type=jnp.float32)             # (tq, hd) f32
            acc_ref[h] = alpha * acc_ref[h] + pv
            m_ref[h] = m_new

    @pl.when(ki == nkv - 1)
    def _finalize():
        # Normalize each head into the concat slab, then ONE full-depth W_O matmul.
        for h in range(n_heads):
            lo = h * head_dim
            hi = lo + head_dim
            inv = pl.reciprocal(l_ref[h], approx=True)          # (tq, 1) on the EUP
            slab_ref[:, lo:hi] = (acc_ref[h] * inv).astype(slab_ref.dtype)
        out = jnp.dot(slab_ref[...], wo_ref[...],
                      preferred_element_type=jnp.float32) + bo_ref[...]
        o_ref[0] = out.astype(o_ref.dtype)


# --------------------------------------------------------------------------------------
# Wrapper
# --------------------------------------------------------------------------------------
def mha_forward(x, wqkv, bqkv, wo, bo, freqs_cos, freqs_sin, n_heads,
                *, ts=None, tq=None, tk=None):
    B, S, D = x.shape
    hd = D // n_heads
    hd2 = hd // 2
    assert hd * n_heads == D and hd % 2 == 0

    def pick(t, default):
        t = default if t is None else t
        assert S % t == 0, "seq length must be a multiple of the tile size"
        return t

    ts = pick(ts, S if S <= 256 else 256)
    tq = pick(tq, S if S <= 256 else 256)
    tk = pick(tk, S if S <= 512 else 512)

    # ---- host-side weight prep (layout plumbing, done once) ----
    # De-interleave each head's Q/K columns to [evens | odds]; fold the softmax scale
    # into W_Q / b_Q (exact: scaling commutes with the rotation).
    perm = jnp.concatenate([jnp.arange(0, hd, 2), jnp.arange(1, hd, 2)])
    perm_full = (jnp.arange(n_heads)[:, None] * hd + perm[None, :]).reshape(-1)
    scale = jnp.float32(1.0 / (hd ** 0.5))

    wq = wqkv[:, :D][:, perm_full] * scale
    wk = wqkv[:, D:2 * D][:, perm_full]
    wv = wqkv[:, 2 * D:]
    wqkv_prep = jnp.concatenate([wq, wk, wv], axis=1).astype(jnp.bfloat16)

    bq = bqkv[:, :D][:, perm_full] * scale
    bk = bqkv[:, D:2 * D][:, perm_full]
    bv = bqkv[:, 2 * D:]
    bqkv_prep = jnp.concatenate([bq, bk, bv], axis=1).astype(jnp.float32)

    wo_bf = wo.astype(jnp.bfloat16)
    bo_f32 = bo.astype(jnp.float32)
    cos = freqs_cos.astype(jnp.float32)                      # (S, hd/2)
    sin = freqs_sin.astype(jnp.float32)

    vmem_limit = 48 * 1024 * 1024     # leaves headroom on v7x's 64 MiB/TC

    # ---- Kernel A: QKV projection + RoPE ----
    kernel_a = functools.partial(qkv_rope_kernel, n_heads=n_heads, head_dim=hd)
    q_rot, k_rot, v = pl.pallas_call(
        kernel_a,
        out_shape=(jax.ShapeDtypeStruct((B, S, D), jnp.bfloat16),) * 3,
        grid_spec=pltpu.PrefetchScalarGridSpec(
            num_scalar_prefetch=0,
            grid=(B, S // ts),
            in_specs=[
                pl.BlockSpec((1, ts, D), lambda b, si: (b, si, 0)),   # x
                pl.BlockSpec((D, 3 * D), lambda b, si: (0, 0)),       # W_QKV (bf16, resident)
                pl.BlockSpec((1, 3 * D), lambda b, si: (0, 0)),       # b_QKV (f32)
                pl.BlockSpec((ts, hd2), lambda b, si: (si, 0)),       # cos (S, hd/2)
                pl.BlockSpec((ts, hd2), lambda b, si: (si, 0)),       # sin (S, hd/2)
            ],
            out_specs=(pl.BlockSpec((1, ts, D), lambda b, si: (b, si, 0)),) * 3,
        ),
        compiler_params=pltpu.CompilerParams(
            dimension_semantics=("parallel", "parallel"),
            vmem_limit_bytes=vmem_limit),
    )(x, wqkv_prep, bqkv_prep, cos, sin)

    # ---- Kernel B: flash attention + output projection ----
    nq = S // tq
    nkv = S // tk

    def kv_index(b, qi, ki):
        # Clamp to the last key block this query block can attend to: fully-masked kv
        # blocks re-use the previously fetched block (no DMA); compute is skipped in-kernel.
        kmax = (qi * tq + tq - 1) // tk
        return (b, jnp.minimum(ki, kmax), 0)

    kernel_b = functools.partial(flash_attn_kernel, n_heads=n_heads, head_dim=hd)
    out = pl.pallas_call(
        kernel_b,
        out_shape=jax.ShapeDtypeStruct((B, S, D), x.dtype),
        grid_spec=pltpu.PrefetchScalarGridSpec(
            num_scalar_prefetch=0,
            grid=(B, nq, nkv),
            in_specs=[
                pl.BlockSpec((1, tq, D), lambda b, qi, ki: (b, qi, 0)),   # Q (resident over kv)
                pl.BlockSpec((1, tk, D), kv_index),                       # K block
                pl.BlockSpec((1, tk, D), kv_index),                       # V block
                pl.BlockSpec((D, D), lambda b, qi, ki: (0, 0)),           # W_O (bf16, resident)
                pl.BlockSpec((1, D), lambda b, qi, ki: (0, 0)),           # b_O (f32)
            ],
            out_specs=pl.BlockSpec((1, tq, D), lambda b, qi, ki: (b, qi, 0)),
            scratch_shapes=[
                pltpu.VMEM((n_heads, tq, hd), jnp.float32),   # acc (per-head PV accumulator)
                pltpu.VMEM((n_heads, tq, 1), jnp.float32),    # m   (running max)
                pltpu.VMEM((n_heads, tq, 1), jnp.float32),    # l   (running denominator)
                pltpu.VMEM((tq, D), jnp.bfloat16),            # concat slab for W_O
            ],
        ),
        compiler_params=pltpu.CompilerParams(
            dimension_semantics=("parallel", "parallel", "arbitrary"),
            vmem_limit_bytes=vmem_limit),
    )(q_rot, k_rot, v, wo_bf, bo_f32)

    return out


# --------------------------------------------------------------------------------------
# Pure-JAX reference (f32), mirroring the PyTorch forward in eval mode (flash path).
# --------------------------------------------------------------------------------------
def mha_reference(x, wqkv, bqkv, wo, bo, freqs_cos, freqs_sin, n_heads):
    B, S, D = x.shape
    hd = D // n_heads
    qkv = x @ wqkv + bqkv[0]
    q, k, v = jnp.split(qkv, 3, axis=-1)

    def split_heads(t):
        return t.reshape(B, S, n_heads, hd).transpose(0, 2, 1, 3)    # (B, H, S, hd)

    q, k, v = map(split_heads, (q, k, v))

    def rope(t):
        tr = t.reshape(B, n_heads, S, hd // 2, 2)
        xr, xi = tr[..., 0], tr[..., 1]
        c = freqs_cos[None, None]
        s_ = freqs_sin[None, None]
        out_r = xr * c - xi * s_
        out_i = xr * s_ + xi * c
        return jnp.stack([out_r, out_i], axis=-1).reshape(B, n_heads, S, hd)

    q, k = rope(q), rope(k)
    scale = 1.0 / (hd ** 0.5)
    s = jnp.einsum('bhqd,bhkd->bhqk', q, k) * scale
    mask = jnp.tril(jnp.ones((S, S), dtype=bool))
    s = jnp.where(mask, s, -jnp.inf)
    p = jax.nn.softmax(s, axis=-1)
    o = jnp.einsum('bhqk,bhkd->bhqd', p, v)
    o = o.transpose(0, 2, 1, 3).reshape(B, S, D)
    return o @ wo + bo[0]


if __name__ == "__main__":
    # small shapes consistent with the module: batch=2, seq=32, d_model=32, n_heads=4
    # (seq=32 with 16-wide tiles exercises the multi-block online softmax + causal skip)
    B, S, D, H = 2, 32, 32, 4
    hd = D // H

    key = jax.random.PRNGKey(0)
    kx, kw1, kb1, kw2, kb2 = jax.random.split(key, 5)

    x = jax.random.normal(kx, (B, S, D), dtype=jnp.float32)
    wqkv = jax.random.normal(kw1, (D, 3 * D), dtype=jnp.float32) * (D ** -0.5)
    bqkv = jax.random.normal(kb1, (1, 3 * D), dtype=jnp.float32) * 0.02
    wo = jax.random.normal(kw2, (D, D), dtype=jnp.float32) * (D ** -0.5)
    bo = jax.random.normal(kb2, (1, D), dtype=jnp.float32) * 0.02

    # freqs_cis (seq, half_head_dim) with base theta = 10000, passed as cos/sin
    inv_freq = 1.0 / (10000.0 ** (jnp.arange(0, hd, 2, dtype=jnp.float32) / hd))  # (hd/2,)
    t = jnp.arange(S, dtype=jnp.float32)
    angles = jnp.outer(t, inv_freq)                                   # (S, hd/2)
    freqs_cos = jnp.cos(angles)
    freqs_sin = jnp.sin(angles)

    out = mha_forward(x, wqkv, bqkv, wo, bo, freqs_cos, freqs_sin, H,
                      ts=16, tq=16, tk=16)
    out = jax.block_until_ready(out)

    ref = mha_reference(x, wqkv, bqkv, wo, bo, freqs_cos, freqs_sin, H)
    assert out.shape == (B, S, D)
    # bf16 weights + bf16 Q/K/V storage + approx reciprocal -> compare against the f32
    # reference with a bf16-appropriate tolerance.
    err = jnp.max(jnp.abs(out - ref))
    assert jnp.allclose(out, ref, atol=5e-2, rtol=5e-2), f"max abs err {err}"

    print("KERNEL_OK")
</pallas_src>

<mosaic_0001>
module attributes {stable_mosaic.version = 11 : i64} {
  func.func @qkv_rope_kernel(%arg0: i32, %arg1: i32, %arg2: memref<1x16x32xf32, #tpu.memory_space<vmem>>, %arg3: memref<32x96xbf16, #tpu.memory_space<vmem>>, %arg4: memref<1x96xf32, #tpu.memory_space<vmem>>, %arg5: memref<16x4xf32, #tpu.memory_space<vmem>>, %arg6: memref<16x4xf32, #tpu.memory_space<vmem>>, %arg7: memref<1x16x32xbf16, #tpu.memory_space<vmem>>, %arg8: memref<1x16x32xbf16, #tpu.memory_space<vmem>>, %arg9: memref<1x16x32xbf16, #tpu.memory_space<vmem>>) attributes {dimension_semantics = [#tpu.dimension_semantics<parallel>, #tpu.dimension_semantics<parallel>], iteration_bounds = array<i64: 2, 2>, scalar_prefetch = 0 : i64, scratch_operands = 0 : i64, tpu.core_type = #tpu.core_type<tc>, window_params = [{transform_indices = @transform_0, window_bounds = array<i64: 1, 16, 32>}, {pipeline_mode = #tpu.pipeline_mode<synchronous>, transform_indices = @transform_1, window_bounds = array<i64: 32, 96>}, {pipeline_mode = #tpu.pipeline_mode<synchronous>, transform_indices = @transform_2, window_bounds = array<i64: 1, 96>}, {transform_indices = @transform_3, window_bounds = array<i64: 16, 4>}, {transform_indices = @transform_4, window_bounds = array<i64: 16, 4>}, {transform_indices = @transform_5, window_bounds = array<i64: 1, 16, 32>}, {transform_indices = @transform_6, window_bounds = array<i64: 1, 16, 32>}, {transform_indices = @transform_7, window_bounds = array<i64: 1, 16, 32>}]} {
    %c0 = arith.constant 0 : index
    %c0_0 = arith.constant 0 : index
    %c0_1 = arith.constant 0 : index
    %0 = vector.load %arg2[%c0, %c0_0, %c0_1] : memref<1x16x32xf32, #tpu.memory_space<vmem>>, vector<1x16x32xf32>
    %1 = vector.shape_cast %0 : vector<1x16x32xf32> to vector<16x32xf32>
    %2 = arith.truncf %1 : vector<16x32xf32> to vector<16x32xbf16>
    %c0_2 = arith.constant 0 : index
    %c0_3 = arith.constant 0 : index
    %3 = vector.load %arg3[%c0_2, %c0_3] : memref<32x96xbf16, #tpu.memory_space<vmem>>, vector<32x96xbf16>
    %cst = arith.constant dense<0.000000e+00> : vector<16x96xf32>
    %4 = tpu.matmul %2, %3, %cst {dimension_numbers = #tpu.dot_dimension_numbers<[1], [0], [0], [1], [0, 0, 1, 1], [], []>} : vector<16x32xbf16>, vector<32x96xbf16>, vector<16x96xf32> -> vector<16x96xf32>
    %c0_4 = arith.constant 0 : index
    %c0_5 = arith.constant 0 : index
    %5 = vector.load %arg4[%c0_4, %c0_5] : memref<1x96xf32, #tpu.memory_space<vmem>>, vector<1x96xf32>
    %6 = vector.broadcast %5 : vector<1x96xf32> to vector<16x96xf32>
    %7 = arith.addf %4, %6 : vector<16x96xf32>
    %8 = vector.extract_strided_slice %7 {offsets = [0, 0], sizes = [16, 32], strides = [1, 1]} : vector<16x96xf32> to vector<16x32xf32>
    %9 = vector.extract_strided_slice %7 {offsets = [0, 32], sizes = [16, 32], strides = [1, 1]} : vector<16x96xf32> to vector<16x32xf32>
    %10 = vector.extract_strided_slice %7 {offsets = [0, 64], sizes = [16, 32], strides = [1, 1]} : vector<16x96xf32> to vector<16x32xf32>
    %11 = arith.truncf %10 : vector<16x32xf32> to vector<16x32xbf16>
    %c0_6 = arith.constant 0 : index
    %c0_7 = arith.constant 0 : index
    %c0_8 = arith.constant 0 : index
    %12 = vector.load %arg9[%c0_6, %c0_7, %c0_8] : memref<1x16x32xbf16, #tpu.memory_space<vmem>>, vector<1x16x32xbf16>
    %13 = vector.shape_cast %12 : vector<1x16x32xbf16> to vector<16x32xbf16>
    %14 = vector.shape_cast %11 : vector<16x32xbf16> to vector<1x16x32xbf16>
    tpu.vector_store %arg9[%c0_6, %c0_7, %c0_8], %14 {strides = array<i32>} : memref<1x16x32xbf16, #tpu.memory_space<vmem>>, vector<1x16x32xbf16>,
    %c0_9 = arith.constant 0 : index
    %c0_10 = arith.constant 0 : index
    %15 = vector.load %arg5[%c0_9, %c0_10] : memref<16x4xf32, #tpu.memory_space<vmem>>, vector<16x4xf32>
    %c0_11 = arith.constant 0 : index
    %c0_12 = arith.constant 0 : index
    %16 = vector.load %arg6[%c0_11, %c0_12] : memref<16x4xf32, #tpu.memory_space<vmem>>, vector<16x4xf32>
    %17 = vector.extract_strided_slice %8 {offsets = [0, 0], sizes = [16, 4], strides = [1, 1]} : vector<16x32xf32> to vector<16x4xf32>
    %18 = vector.extract_strided_slice %8 {offsets = [0, 4], sizes = [16, 4], strides = [1, 1]} : vector<16x32xf32> to vector<16x4xf32>
    %19 = vector.extract_strided_slice %9 {offsets = [0, 0], sizes = [16, 4], strides = [1, 1]} : vector<16x32xf32> to vector<16x4xf32>
    %20 = vector.extract_strided_slice %9 {offsets = [0, 4], sizes = [16, 4], strides = [1, 1]} : vector<16x32xf32> to vector<16x4xf32>
    %21 = arith.mulf %17, %15 : vector<16x4xf32>
    %22 = arith.mulf %18, %16 : vector<16x4xf32>
    %23 = arith.subf %21, %22 : vector<16x4xf32>
    %24 = arith.truncf %23 : vector<16x4xf32> to vector<16x4xbf16>
    %c0_13 = arith.constant 0 : index
    %c0_14 = arith.constant 0 : index
    %c0_15 = arith.constant 0 : index
    %25 = vector.load %arg7[%c0_13, %c0_14, %c0_15] : memref<1x16x32xbf16, #tpu.memory_space<vmem>>, vector<1x16x4xbf16>
    %26 = vector.shape_cast %25 : vector<1x16x4xbf16> to vector<16x4xbf16>
    %27 = vector.shape_cast %24 : vector<16x4xbf16> to vector<1x16x4xbf16>
    tpu.vector_store %arg7[%c0_13, %c0_14, %c0_15], %27 {strides = array<i32>} : memref<1x16x32xbf16, #tpu.memory_space<vmem>>, vector<1x16x4xbf16>,
    %28 = arith.mulf %18, %15 : vector<16x4xf32>
    %29 = arith.mulf %17, %16 : vector<16x4xf32>
    %30 = arith.addf %28, %29 : vector<16x4xf32>
    %31 = arith.truncf %30 : vector<16x4xf32> to vector<16x4xbf16>
    %c0_16 = arith.constant 0 : index
    %c0_17 = arith.constant 0 : index
    %c4 = arith.constant 4 : index
    %32 = vector.load %arg7[%c0_16, %c0_17, %c4] : memref<1x16x32xbf16, #tpu.memory_space<vmem>>, vector<1x16x4xbf16>
    %33 = vector.shape_cast %32 : vector<1x16x4xbf16> to vector<16x4xbf16>
    %34 = vector.shape_cast %31 : vector<16x4xbf16> to vector<1x16x4xbf16>
    tpu.vector_store %arg7[%c0_16, %c0_17, %c4], %34 {strides = array<i32>} : memref<1x16x32xbf16, #tpu.memory_space<vmem>>, vector<1x16x4xbf16>,
    %35 = arith.mulf %19, %15 : vector<16x4xf32>
    %36 = arith.mulf %20, %16 : vector<16x4xf32>
    %37 = arith.subf %35, %36 : vector<16x4xf32>
    %38 = arith.truncf %37 : vector<16x4xf32> to vector<16x4xbf16>
    %c0_18 = arith.constant 0 : index
    %c0_19 = arith.constant 0 : index
    %c0_20 = arith.constant 0 : index
    %39 = vector.load %arg8[%c0_18, %c0_19, %c0_20] : memref<1x16x32xbf16, #tpu.memory_space<vmem>>, vector<1x16x4xbf16>
    %40 = vector.shape_cast %39 : vector<1x16x4xbf16> to vector<16x4xbf16>
    %41 = vector.shape_cast %38 : vector<16x4xbf16> to vector<1x16x4xbf16>
    tpu.vector_store %arg8[%c0_18, %c0_19, %c0_20], %41 {strides = array<i32>} : memref<1x16x32xbf16, #tpu.memory_space<vmem>>, vector<1x16x4xbf16>,
    %42 = arith.mulf %20, %15 : vector<16x4xf32>
    %43 = arith.mulf %19, %16 : vector<16x4xf32>
    %44 = arith.addf %42, %43 : vector<16x4xf32>
    %45 = arith.truncf %44 : vector<16x4xf32> to vector<16x4xbf16>
    %c0_21 = arith.constant 0 : index
    %c0_22 = arith.constant 0 : index
    %c4_23 = arith.constant 4 : index
    %46 = vector.load %arg8[%c0_21, %c0_22, %c4_23] : memref<1x16x32xbf16, #tpu.memory_space<vmem>>, vector<1x16x4xbf16>
    %47 = vector.shape_cast %46 : vector<1x16x4xbf16> to vector<16x4xbf16>
    %48 = vector.shape_cast %45 : vector<16x4xbf16> to vector<1x16x4xbf16>
    tpu.vector_store %arg8[%c0_21, %c0_22, %c4_23], %48 {strides = array<i32>} : memref<1x16x32xbf16, #tpu.memory_space<vmem>>, vector<1x16x4xbf16>,
    %49 = vector.extract_strided_slice %8 {offsets = [0, 8], sizes = [16, 4], strides = [1, 1]} : vector<16x32xf32> to vector<16x4xf32>
    %50 = vector.extract_strided_slice %8 {offsets = [0, 12], sizes = [16, 4], strides = [1, 1]} : vector<16x32xf32> to vector<16x4xf32>
    %51 = vector.extract_strided_slice %9 {offsets = [0, 8], sizes = [16, 4], strides = [1, 1]} : vector<16x32xf32> to vector<16x4xf32>
    %52 = vector.extract_strided_slice %9 {offsets = [0, 12], sizes = [16, 4], strides = [1, 1]} : vector<16x32xf32> to vector<16x4xf32>
    %53 = arith.mulf %49, %15 : vector<16x4xf32>
    %54 = arith.mulf %50, %16 : vector<16x4xf32>
    %55 = arith.subf %53, %54 : vector<16x4xf32>
    %56 = arith.truncf %55 : vector<16x4xf32> to vector<16x4xbf16>
    %c0_24 = arith.constant 0 : index
    %c0_25 = arith.constant 0 : index
    %c8 = arith.constant 8 : index
    %57 = vector.load %arg7[%c0_24, %c0_25, %c8] : memref<1x16x32xbf16, #tpu.memory_space<vmem>>, vector<1x16x4xbf16>
    %58 = vector.shape_cast %57 : vector<1x16x4xbf16> to vector<16x4xbf16>
    %59 = vector.shape_cast %56 : vector<16x4xbf16> to vector<1x16x4xbf16>
    tpu.vector_store %arg7[%c0_24, %c0_25, %c8], %59 {strides = array<i32>} : memref<1x16x32xbf16, #tpu.memory_space<vmem>>, vector<1x16x4xbf16>,
    %60 = arith.mulf %50, %15 : vector<16x4xf32>
    %61 = arith.mulf %49, %16 : vector<16x4xf32>
    %62 = arith.addf %60, %61 : vector<16x4xf32>
    %63 = arith.truncf %62 : vector<16x4xf32> to vector<16x4xbf16>
    %c0_26 = arith.constant 0 : index
    %c0_27 = arith.constant 0 : index
    %c12 = arith.constant 12 : index
    %64 = vector.load %arg7[%c0_26, %c0_27, %c12] : memref<1x16x32xbf16, #tpu.memory_space<vmem>>, vector<1x16x4xbf16>
    %65 = vector.shape_cast %64 : vector<1x16x4xbf16> to vector<16x4xbf16>
    %66 = vector.shape_cast %63 : vector<16x4xbf16> to vector<1x16x4xbf16>
    tpu.vector_store %arg7[%c0_26, %c0_27, %c12], %66 {strides = array<i32>} : memref<1x16x32xbf16, #tpu.memory_space<vmem>>, vector<1x16x4xbf16>,
    %67 = arith.mulf %51, %15 : vector<16x4xf32>
    %68 = arith.mulf %52, %16 : vector<16x4xf32>
    %69 = arith.subf %67, %68 : vector<16x4xf32>
    %70 = arith.truncf %69 : vector<16x4xf32> to vector<16x4xbf16>
    %c0_28 = arith.constant 0 : index
    %c0_29 = arith.constant 0 : index
    %c8_30 = arith.constant 8 : index
    %71 = vector.load %arg8[%c0_28, %c0_29, %c8_30] : memref<1x16x32xbf16, #tpu.memory_space<vmem>>, vector<1x16x4xbf16>
    %72 = vector.shape_cast %71 : vector<1x16x4xbf16> to vector<16x4xbf16>
    %73 = vector.shape_cast %70 : vector<16x4xbf16> to vector<1x16x4xbf16>
    tpu.vector_store %arg8[%c0_28, %c0_29, %c8_30], %73 {strides = array<i32>} : memref<1x16x32xbf16, #tpu.memory_space<vmem>>, vector<1x16x4xbf16>,
    %74 = arith.mulf %52, %15 : vector<16x4xf32>
    %75 = arith.mulf %51, %16 : vector<16x4xf32>
    %76 = arith.addf %74, %75 : vector<16x4xf32>
    %77 = arith.truncf %76 : vector<16x4xf32> to vector<16x4xbf16>
    %c0_31 = arith.constant 0 : index
    %c0_32 = arith.constant 0 : index
    %c12_33 = arith.constant 12 : index
    %78 = vector.load %arg8[%c0_31, %c0_32, %c12_33] : memref<1x16x32xbf16, #tpu.memory_space<vmem>>, vector<1x16x4xbf16>
    %79 = vector.shape_cast %78 : vector<1x16x4xbf16> to vector<16x4xbf16>
    %80 = vector.shape_cast %77 : vector<16x4xbf16> to vector<1x16x4xbf16>
    tpu.vector_store %arg8[%c0_31, %c0_32, %c12_33], %80 {strides = array<i32>} : memref<1x16x32xbf16, #tpu.memory_space<vmem>>, vector<1x16x4xbf16>,
    %81 = vector.extract_strided_slice %8 {offsets = [0, 16], sizes = [16, 4], strides = [1, 1]} : vector<16x32xf32> to vector<16x4xf32>
    %82 = vector.extract_strided_slice %8 {offsets = [0, 20], sizes = [16, 4], strides = [1, 1]} : vector<16x32xf32> to vector<16x4xf32>
    %83 = vector.extract_strided_slice %9 {offsets = [0, 16], sizes = [16, 4], strides = [1, 1]} : vector<16x32xf32> to vector<16x4xf32>
    %84 = vector.extract_strided_slice %9 {offsets = [0, 20], sizes = [16, 4], strides = [1, 1]} : vector<16x32xf32> to vector<16x4xf32>
    %85 = arith.mulf %81, %15 : vector<16x4xf32>
    %86 = arith.mulf %82, %16 : vector<16x4xf32>
    %87 = arith.subf %85, %86 : vector<16x4xf32>
    %88 = arith.truncf %87 : vector<16x4xf32> to vector<16x4xbf16>
    %c0_34 = arith.constant 0 : index
    %c0_35 = arith.constant 0 : index
    %c16 = arith.constant 16 : index
    %89 = vector.load %arg7[%c0_34, %c0_35, %c16] : memref<1x16x32xbf16, #tpu.memory_space<vmem>>, vector<1x16x4xbf16>
    %90 = vector.shape_cast %89 : vector<1x16x4xbf16> to vector<16x4xbf16>
    %91 = vector.shape_cast %88 : vector<16x4xbf16> to vector<1x16x4xbf16>
    tpu.vector_store %arg7[%c0_34, %c0_35, %c16], %91 {strides = array<i32>} : memref<1x16x32xbf16, #tpu.memory_space<vmem>>, vector<1x16x4xbf16>,
    %92 = arith.mulf %82, %15 : vector<16x4xf32>
    %93 = arith.mulf %81, %16 : vector<16x4xf32>
    %94 = arith.addf %92, %93 : vector<16x4xf32>
    %95 = arith.truncf %94 : vector<16x4xf32> to vector<16x4xbf16>
    %c0_36 = arith.constant 0 : index
    %c0_37 = arith.constant 0 : index
    %c20 = arith.constant 20 : index
    %96 = vector.load %arg7[%c0_36, %c0_37, %c20] : memref<1x16x32xbf16, #tpu.memory_space<vmem>>, vector<1x16x4xbf16>
    %97 = vector.shape_cast %96 : vector<1x16x4xbf16> to vector<16x4xbf16>
    %98 = vector.shape_cast %95 : vector<16x4xbf16> to vector<1x16x4xbf16>
    tpu.vector_store %arg7[%c0_36, %c0_37, %c20], %98 {strides = array<i32>} : memref<1x16x32xbf16, #tpu.memory_space<vmem>>, vector<1x16x4xbf16>,
    %99 = arith.mulf %83, %15 : vector<16x4xf32>
    %100 = arith.mulf %84, %16 : vector<16x4xf32>
    %101 = arith.subf %99, %100 : vector<16x4xf32>
    %102 = arith.truncf %101 : vector<16x4xf32> to vector<16x4xbf16>
    %c0_38 = arith.constant 0 : index
    %c0_39 = arith.constant 0 : index
    %c16_40 = arith.constant 16 : index
    %103 = vector.load %arg8[%c0_38, %c0_39, %c16_40] : memref<1x16x32xbf16, #tpu.memory_space<vmem>>, vector<1x16x4xbf16>
    %104 = vector.shape_cast %103 : vector<1x16x4xbf16> to vector<16x4xbf16>
    %105 = vector.shape_cast %102 : vector<16x4xbf16> to vector<1x16x4xbf16>
    tpu.vector_store %arg8[%c0_38, %c0_39, %c16_40], %105 {strides = array<i32>} : memref<1x16x32xbf16, #tpu.memory_space<vmem>>, vector<1x16x4xbf16>,
    %106 = arith.mulf %84, %15 : vector<16x4xf32>
    %107 = arith.mulf %83, %16 : vector<16x4xf32>
    %108 = arith.addf %106, %107 : vector<16x4xf32>
    %109 = arith.truncf %108 : vector<16x4xf32> to vector<16x4xbf16>
    %c0_41 = arith.constant 0 : index
    %c0_42 = arith.constant 0 : index
    %c20_43 = arith.constant 20 : index
    %110 = vector.load %arg8[%c0_41, %c0_42, %c20_43] : memref<1x16x32xbf16, #tpu.memory_space<vmem>>, vector<1x16x4xbf16>
    %111 = vector.shape_cast %110 : vector<1x16x4xbf16> to vector<16x4xbf16>
    %112 = vector.shape_cast %109 : vector<16x4xbf16> to vector<1x16x4xbf16>
    tpu.vector_store %arg8[%c0_41, %c0_42, %c20_43], %112 {strides = array<i32>} : memref<1x16x32xbf16, #tpu.memory_space<vmem>>, vector<1x16x4xbf16>,
    %113 = vector.extract_strided_slice %8 {offsets = [0, 24], sizes = [16, 4], strides = [1, 1]} : vector<16x32xf32> to vector<16x4xf32>
    %114 = vector.extract_strided_slice %8 {offsets = [0, 28], sizes = [16, 4], strides = [1, 1]} : vector<16x32xf32> to vector<16x4xf32>
    %115 = vector.extract_strided_slice %9 {offsets = [0, 24], sizes = [16, 4], strides = [1, 1]} : vector<16x32xf32> to vector<16x4xf32>
    %116 = vector.extract_strided_slice %9 {offsets = [0, 28], sizes = [16, 4], strides = [1, 1]} : vector<16x32xf32> to vector<16x4xf32>
    %117 = arith.mulf %113, %15 : vector<16x4xf32>
    %118 = arith.mulf %114, %16 : vector<16x4xf32>
    %119 = arith.subf %117, %118 : vector<16x4xf32>
    %120 = arith.truncf %119 : vector<16x4xf32> to vector<16x4xbf16>
    %c0_44 = arith.constant 0 : index
    %c0_45 = arith.constant 0 : index
    %c24 = arith.constant 24 : index
    %121 = vector.load %arg7[%c0_44, %c0_45, %c24] : memref<1x16x32xbf16, #tpu.memory_space<vmem>>, vector<1x16x4xbf16>
    %122 = vector.shape_cast %121 : vector<1x16x4xbf16> to vector<16x4xbf16>
    %123 = vector.shape_cast %120 : vector<16x4xbf16> to vector<1x16x4xbf16>
    tpu.vector_store %arg7[%c0_44, %c0_45, %c24], %123 {strides = array<i32>} : memref<1x16x32xbf16, #tpu.memory_space<vmem>>, vector<1x16x4xbf16>,
    %124 = arith.mulf %114, %15 : vector<16x4xf32>
    %125 = arith.mulf %113, %16 : vector<16x4xf32>
    %126 = arith.addf %124, %125 : vector<16x4xf32>
    %127 = arith.truncf %126 : vector<16x4xf32> to vector<16x4xbf16>
    %c0_46 = arith.constant 0 : index
    %c0_47 = arith.constant 0 : index
    %c28 = arith.constant 28 : index
    %128 = vector.load %arg7[%c0_46, %c0_47, %c28] : memref<1x16x32xbf16, #tpu.memory_space<vmem>>, vector<1x16x4xbf16>
    %129 = vector.shape_cast %128 : vector<1x16x4xbf16> to vector<16x4xbf16>
    %130 = vector.shape_cast %127 : vector<16x4xbf16> to vector<1x16x4xbf16>
    tpu.vector_store %arg7[%c0_46, %c0_47, %c28], %130 {strides = array<i32>} : memref<1x16x32xbf16, #tpu.memory_space<vmem>>, vector<1x16x4xbf16>,
    %131 = arith.mulf %115, %15 : vector<16x4xf32>
    %132 = arith.mulf %116, %16 : vector<16x4xf32>
    %133 = arith.subf %131, %132 : vector<16x4xf32>
    %134 = arith.truncf %133 : vector<16x4xf32> to vector<16x4xbf16>
    %c0_48 = arith.constant 0 : index
    %c0_49 = arith.constant 0 : index
    %c24_50 = arith.constant 24 : index
    %135 = vector.load %arg8[%c0_48, %c0_49, %c24_50] : memref<1x16x32xbf16, #tpu.memory_space<vmem>>, vector<1x16x4xbf16>
    %136 = vector.shape_cast %135 : vector<1x16x4xbf16> to vector<16x4xbf16>
    %137 = vector.shape_cast %134 : vector<16x4xbf16> to vector<1x16x4xbf16>
    tpu.vector_store %arg8[%c0_48, %c0_49, %c24_50], %137 {strides = array<i32>} : memref<1x16x32xbf16, #tpu.memory_space<vmem>>, vector<1x16x4xbf16>,
    %138 = arith.mulf %116, %15 : vector<16x4xf32>
    %139 = arith.mulf %115, %16 : vector<16x4xf32>
    %140 = arith.addf %138, %139 : vector<16x4xf32>
    %141 = arith.truncf %140 : vector<16x4xf32> to vector<16x4xbf16>
    %c0_51 = arith.constant 0 : index
    %c0_52 = arith.constant 0 : index
    %c28_53 = arith.constant 28 : index
    %142 = vector.load %arg8[%c0_51, %c0_52, %c28_53] : memref<1x16x32xbf16, #tpu.memory_space<vmem>>, vector<1x16x4xbf16>
    %143 = vector.shape_cast %142 : vector<1x16x4xbf16> to vector<16x4xbf16>
    %144 = vector.shape_cast %141 : vector<16x4xbf16> to vector<1x16x4xbf16>
    tpu.vector_store %arg8[%c0_51, %c0_52, %c28_53], %144 {strides = array<i32>} : memref<1x16x32xbf16, #tpu.memory_space<vmem>>, vector<1x16x4xbf16>,
    return
  }
  func.func @transform_0(%arg0: i32, %arg1: i32) -> (i32, i32, i32) {
    %c0_i32 = arith.constant 0 : i32
    %c0_i32_0 = arith.constant 0 : i32
    return %arg0, %arg1, %c0_i32 : i32, i32, i32
  }
  func.func @transform_1(%arg0: i32, %arg1: i32) -> (i32, i32) {
    %c0_i32 = arith.constant 0 : i32
    %c0_i32_0 = arith.constant 0 : i32
    %c0_i32_1 = arith.constant 0 : i32
    return %c0_i32, %c0_i32_0 : i32, i32
  }
  func.func @transform_2(%arg0: i32, %arg1: i32) -> (i32, i32) {
    %c0_i32 = arith.constant 0 : i32
    %c0_i32_0 = arith.constant 0 : i32
    %c0_i32_1 = arith.constant 0 : i32
    return %c0_i32, %c0_i32_0 : i32, i32
  }
  func.func @transform_3(%arg0: i32, %arg1: i32) -> (i32, i32) {
    %c0_i32 = arith.constant 0 : i32
    %c0_i32_0 = arith.constant 0 : i32
    return %arg1, %c0_i32 : i32, i32
  }
  func.func @transform_4(%arg0: i32, %arg1: i32) -> (i32, i32) {
    %c0_i32 = arith.constant 0 : i32
    %c0_i32_0 = arith.constant 0 : i32
    return %arg1, %c0_i32 : i32, i32
  }
  func.func @transform_5(%arg0: i32, %arg1: i32) -> (i32, i32, i32) {
    %c0_i32 = arith.constant 0 : i32
    %c0_i32_0 = arith.constant 0 : i32
    return %arg0, %arg1, %c0_i32 : i32, i32, i32
  }
  func.func @transform_6(%arg0: i32, %arg1: i32) -> (i32, i32, i32) {
    %c0_i32 = arith.constant 0 : i32
    %c0_i32_0 = arith.constant 0 : i32
    return %arg0, %arg1, %c0_i32 : i32, i32, i32
  }
  func.func @transform_7(%arg0: i32, %arg1: i32) -> (i32, i32, i32) {
    %c0_i32 = arith.constant 0 : i32
    %c0_i32_0 = arith.constant 0 : i32
    return %arg0, %arg1, %c0_i32 : i32, i32, i32
  }
}

</mosaic_0001>

<llo_original>
// kernel: tpu_custom_call.1
$region0: #{tpu_custom_call.1}
  #allocation0 [shape = 'u32[]', space=smem, size = 0x4, offset = 0x4, fixed_abs, tag = 'smem constant byte address 0x4 - core index']
  #allocation1 [shape = 'u32[144,128]{1,0:T(1,128)}', space=vmem, size = 0x12000, scoped, tag = 'internal scratch']
  %s0 = inlined_call_operand.vmem [shape: f32[2,32,32], index: 0, kind: input, shape index: {}]
  %s1 = inlined_call_operand.hbm [shape: bf16[32,96], index: 1, kind: input, shape index: {}]
  %s2 = inlined_call_operand.vmem [shape: f32[1,96], index: 2, kind: input, shape index: {}]
  %s3 = inlined_call_operand.vmem [shape: f32[32,4], index: 3, kind: input, shape index: {}]
  %s4 = inlined_call_operand.vmem [shape: f32[32,4], index: 4, kind: input, shape index: {}]
  %s5 = inlined_call_operand.hbm [shape: bf16[2,32,32], index: 5, kind: output, shape index: {0}]
  %s6 = inlined_call_operand.hbm [shape: bf16[2,32,32], index: 6, kind: output, shape index: {1}]
  %s7 = inlined_call_operand.hbm [shape: bf16[2,32,32], index: 7, kind: output, shape index: {2}]
  %8 = xla_tuple %s5, %s6, %s7
  %s9 = sld [smem:[#allocation0]]
  $region73: #{tpu_custom_call.1} parent=0
    _
  %s11 = ssub.s32 1, %s9
  %s12 = scalar_select 0, %s11, %s9
  $region1: #{tpu_custom_call.1} parent=0
    #allocation2 [shape = 'u8[8192]{0}', space=vmem, size = 0x2000, scoped, tag = 'input window, operand 1, single buffered']
    #allocation3 [shape = 's32[2]{0}', space=sflag, size = 0x8, scoped, tag = 'scoped memory for tpu_custom_call.1']
    #allocation4 [shape = 's32[2]{0}', space=sflag, size = 0x8, scoped, tag = 'scoped memory for tpu_custom_call.1']
    #allocation5 [shape = 'u8[8192]{0}', space=vmem, size = 0x2000, scoped, tag = 'output window, operand 0']
    #allocation6 [shape = 'u8[8192]{0}', space=vmem, size = 0x2000, scoped, tag = 'output window, operand 1']
    #allocation7 [shape = 's32[2]{0}', space=sflag, size = 0x8, scoped, tag = 'scoped memory for tpu_custom_call.1']
    #allocation8 [shape = 'u8[8192]{0}', space=vmem, size = 0x2000, scoped, tag = 'output window, operand 2']
    %13 = vsyncpa [#allocation3], 0
    %14 = vsyncpa [#allocation4], 0
    %s15 = scalar_lea.sflag [#allocation4], 1
    %16 = vsyncpa %s15, 0
    %17 = vsyncpa [#allocation7], 0
    %s18 = scalar_lea.sflag [#allocation7], 1
    %19 = vsyncpa %s18, 0
    loop: start=0, step=1, limit=6
    $region2: #{tpu_custom_call.1} parent=1 // loop_pre_header
      _
    $region3: #{tpu_custom_call.1} parent=1 // loop_header
      %s21 = sphi 0, %s25
      %p22 = scmp.ge.s32.totalorder %s21, 6
      %s28 = sphi 0, %s40
      %s29 = sphi 0, %s36
      %s30 = sphi 0, %s28
      %s31 = sphi 0, %s29
      %s32 = sphi 0, %s30
      %s33 = sphi 0, %s31
      %s45 = sphi 0, %s47
      %s48 = sphi 0, %s45
      %s49 = sphi 0, %s48
      %s65 = sphi 0, %s49
      %s69 = sphi 0, %s69
      %s71 = sphi 0, %s69
      %s72 = sphi 0, %s71
      %s86 = sphi 0, %s72
      %s90 = sphi 0, %s90
      %s92 = sphi 0, %s90
      %s93 = sphi 0, %s92
      %s107 = sphi 0, %s93
      %s113 = sphi 0, %s115
      %s116 = sphi 0, %s113
      %s117 = sphi 0, %s116
      %s133 = sphi 0, %s117
      %s139 = sphi 0, %s141
      %s142 = sphi 0, %s139
      %s143 = sphi 0, %s142
      %s159 = sphi 0, %s143
      %s167 = sphi 0, %s169
      %s170 = sphi 0, %s167
      %s171 = sphi 0, %s170
      %s187 = sphi 0, %s171
      %s195 = sphi 0, %s197
      %s198 = sphi 0, %s195
      %s199 = sphi 0, %s198
      %s215 = sphi 0, %s199
      %s223 = sphi 0, %s225
      %s226 = sphi 0, %s223
      %s227 = sphi 0, %s226
      %s243 = sphi 0, %s227
    $region4: #{tpu_custom_call.1} parent=1 // loop_header_branch
      %24 = sbr.rel (%p22) target = $region8
    $region5: #{tpu_custom_call.1} parent=1 // loop_body
      %s26 = ssub.s32 %s21, 1
      %s27 = ssub.s32 %s21, 2
      %s34 = sadd.s32 1, %s29
      %p35 = scmp.ge.s32.totalorder %s34, 2
      %s36 = scalar_select %p35, 0, %s34
      %s37 = sadd.s32 1, %s28
      %s38 = scalar_select %p35, %s37, %s28
      %p39 = scmp.ge.s32.totalorder %s38, 2
      %s40 = scalar_select %p39, 0, %s38
      %s41 = ssub.s32 %s28, %s40
      %s42 = ssub.s32 %s29, %s36
      %s43 = sor.u32 %s41, %s42
      %p44 = scmp.eq.s32.totalorder %s43, 0
      %s46 = sadd.s32 %s45, 1
      %s47 = scalar_select %p44, %s45, %s46
      %p50 = pneg %p44
      %p51 = scmp.eq.s32.totalorder %s21, 3
      %p52 = por %p50, %p51
      %p53 = scmp.ne.s32.totalorder %s45, %s48
      %p54 = scmp.eq.s32.totalorder %s21, 0
      %p55 = por %p53, %p54
      %p56 = scmp.ne.s32.totalorder %s45, %s48
      %p57 = scmp.eq.s32.totalorder %s26, 3
      %p58 = por %p56, %p57
      %p59 = scmp.ne.s32.totalorder %s48, %s49
      %p60 = scmp.eq.s32.totalorder %s26, 0
      %p61 = por %p59, %p60
      %p62 = scmp.ne.s32.totalorder %s48, %s49
      %p63 = scmp.eq.s32.totalorder %s27, 3
      %p64 = por %p62, %p63
      %p66 = scmp.ne.s32.totalorder %s49, %s65
      %p67 = scmp.eq.s32.totalorder %s27, 0
      %p68 = por %p66, %p67
      %s70 = sadd.s32 %s69, 1
      %p73 = scmp.eq.s32.totalorder %s21, 3
      %p74 = scmp.ne.s32.totalorder %s69, %s71
      %p75 = scmp.eq.s32.totalorder %s21, 0
      %p76 = por %p74, %p75
      %p77 = scmp.ne.s32.totalorder %s69, %s71
      %p78 = scmp.eq.s32.totalorder %s26, 3
      %p79 = por %p77, %p78
      %p80 = scmp.ne.s32.totalorder %s71, %s72
      %p81 = scmp.eq.s32.totalorder %s26, 0
      %p82 = por %p80, %p81
      %p83 = scmp.ne.s32.totalorder %s71, %s72
      %p84 = scmp.eq.s32.totalorder %s27, 3
      %p85 = por %p83, %p84
      %p87 = scmp.ne.s32.totalorder %s72, %s86
      %p88 = scmp.eq.s32.totalorder %s27, 0
      %p89 = por %p87, %p88
      %s91 = sadd.s32 %s90, 1
      %p94 = scmp.eq.s32.totalorder %s21, 3
      %p95 = scmp.ne.s32.totalorder %s90, %s92
      %p96 = scmp.eq.s32.totalorder %s21, 0
      %p97 = por %p95, %p96
      %p98 = scmp.ne.s32.totalorder %s90, %s92
      %p99 = scmp.eq.s32.totalorder %s26, 3
      %p100 = por %p98, %p99
      %p101 = scmp.ne.s32.totalorder %s92, %s93
      %p102 = scmp.eq.s32.totalorder %s26, 0
      %p103 = por %p101, %p102
      %p104 = scmp.ne.s32.totalorder %s92, %s93
      %p105 = scmp.eq.s32.totalorder %s27, 3
      %p106 = por %p104, %p105
      %p108 = scmp.ne.s32.totalorder %s93, %s107
      %p109 = scmp.eq.s32.totalorder %s27, 0
      %p110 = por %p108, %p109
      %s111 = ssub.s32 %s29, %s36
      %p112 = scmp.eq.s32.totalorder %s111, 0
      %s114 = sadd.s32 %s113, 1
      %s115 = scalar_select %p112, %s113, %s114
      %p118 = pneg %p112
      %p119 = scmp.eq.s32.totalorder %s21, 3
      %p120 = por %p118, %p119
      %p121 = scmp.ne.s32.totalorder %s113, %s116
      %p122 = scmp.eq.s32.totalorder %s21, 0
      %p123 = por %p121, %p122
      %p124 = scmp.ne.s32.totalorder %s113, %s116
      %p125 = scmp.eq.s32.totalorder %s26, 3
      %p126 = por %p124, %p125
      %p127 = scmp.ne.s32.totalorder %s116, %s117
      %p128 = scmp.eq.s32.totalorder %s26, 0
      %p129 = por %p127, %p128
      %p130 = scmp.ne.s32.totalorder %s116, %s117
      %p131 = scmp.eq.s32.totalorder %s27, 3
      %p132 = por %p130, %p131
      %p134 = scmp.ne.s32.totalorder %s117, %s133
      %p135 = scmp.eq.s32.totalorder %s27, 0
      %p136 = por %p134, %p135
      %s137 = ssub.s32 %s29, %s36
      %p138 = scmp.eq.s32.totalorder %s137, 0
      %s140 = sadd.s32 %s139, 1
      %s141 = scalar_select %p138, %s139, %s140
      %p144 = pneg %p138
      %p145 = scmp.eq.s32.totalorder %s21, 3
      %p146 = por %p144, %p145
      %p147 = scmp.ne.s32.totalorder %s139, %s142
      %p148 = scmp.eq.s32.totalorder %s21, 0
      %p149 = por %p147, %p148
      %p150 = scmp.ne.s32.totalorder %s139, %s142
      %p151 = scmp.eq.s32.totalorder %s26, 3
      %p152 = por %p150, %p151
      %p153 = scmp.ne.s32.totalorder %s142, %s143
      %p154 = scmp.eq.s32.totalorder %s26, 0
      %p155 = por %p153, %p154
      %p156 = scmp.ne.s32.totalorder %s142, %s143
      %p157 = scmp.eq.s32.totalorder %s27, 3
      %p158 = por %p156, %p157
      %p160 = scmp.ne.s32.totalorder %s143, %s159
      %p161 = scmp.eq.s32.totalorder %s27, 0
      %p162 = por %p160, %p161
      %s163 = ssub.s32 %s28, %s40
      %s164 = ssub.s32 %s29, %s36
      %s165 = sor.u32 %s163, %s164
      %p166 = scmp.eq.s32.totalorder %s165, 0
      %s168 = sadd.s32 %s167, 1
      %s169 = scalar_select %p166, %s167, %s168
      %p172 = pneg %p166
      %p173 = scmp.eq.s32.totalorder %s21, 3
      %p174 = por %p172, %p173
      %p175 = scmp.ne.s32.totalorder %s167, %s170
      %p176 = scmp.eq.s32.totalorder %s21, 0
      %p177 = por %p175, %p176
      %p178 = scmp.ne.s32.totalorder %s167, %s170
      %p179 = scmp.eq.s32.totalorder %s26, 3
      %p180 = por %p178, %p179
      %p181 = scmp.ne.s32.totalorder %s170, %s171
      %p182 = scmp.eq.s32.totalorder %s26, 0
      %p183 = por %p181, %p182
      %p184 = scmp.ne.s32.totalorder %s170, %s171
      %p185 = scmp.eq.s32.totalorder %s27, 3
      %p186 = por %p184, %p185
      %p188 = scmp.ne.s32.totalorder %s171, %s187
      %p189 = scmp.eq.s32.totalorder %s27, 0
      %p190 = por %p188, %p189
      %s191 = ssub.s32 %s28, %s40
      %s192 = ssub.s32 %s29, %s36
      %s193 = sor.u32 %s191, %s192
      %p194 = scmp.eq.s32.totalorder %s193, 0
      %s196 = sadd.s32 %s195, 1
      %s197 = scalar_select %p194, %s195, %s196
      %p200 = pneg %p194
      %p201 = scmp.eq.s32.totalorder %s21, 3
      %p202 = por %p200, %p201
      %p203 = scmp.ne.s32.totalorder %s195, %s198
      %p204 = scmp.eq.s32.totalorder %s21, 0
      %p205 = por %p203, %p204
      %p206 = scmp.ne.s32.totalorder %s195, %s198
      %p207 = scmp.eq.s32.totalorder %s26, 3
      %p208 = por %p206, %p207
      %p209 = scmp.ne.s32.totalorder %s198, %s199
      %p210 = scmp.eq.s32.totalorder %s26, 0
      %p211 = por %p209, %p210
      %p212 = scmp.ne.s32.totalorder %s198, %s199
      %p213 = scmp.eq.s32.totalorder %s27, 3
      %p214 = por %p212, %p213
      %p216 = scmp.ne.s32.totalorder %s199, %s215
      %p217 = scmp.eq.s32.totalorder %s27, 0
      %p218 = por %p216, %p217
      %s219 = ssub.s32 %s28, %s40
      %s220 = ssub.s32 %s29, %s36
      %s221 = sor.u32 %s219, %s220
      %p222 = scmp.eq.s32.totalorder %s221, 0
      %s224 = sadd.s32 %s223, 1
      %s225 = scalar_select %p222, %s223, %s224
      %p228 = pneg %p222
      %p229 = scmp.eq.s32.totalorder %s21, 3
      %p230 = por %p228, %p229
      %p231 = scmp.ne.s32.totalorder %s223, %s226
      %p232 = scmp.eq.s32.totalorder %s21, 0
      %p233 = por %p231, %p232
      %p234 = scmp.ne.s32.totalorder %s223, %s226
      %p235 = scmp.eq.s32.totalorder %s26, 3
      %p236 = por %p234, %p235
      %p237 = scmp.ne.s32.totalorder %s226, %s227
      %p238 = scmp.eq.s32.totalorder %s26, 0
      %p239 = por %p237, %p238
      %p240 = scmp.ne.s32.totalorder %s226, %s227
      %p241 = scmp.eq.s32.totalorder %s27, 3
      %p242 = por %p240, %p241
      %p244 = scmp.ne.s32.totalorder %s227, %s243
      %p245 = scmp.eq.s32.totalorder %s27, 0
      %p246 = por %p244, %p245
      %p247 = scmp.le.s32.totalorder 1, %s21
      %p248 = scmp.lt.s32.totalorder %s21, 5
      %p249 = pnand %p247, %p248
      %p250 = pneg %p249
      // Predicated region
      $region9: #{tpu_custom_call.1} parent=5 // pred_check
        _
      $region10: #{tpu_custom_call.1} parent=5 // pred_check_branch
        %252 = sbr.rel (%p249) target = $region12
      $region11: #{tpu_custom_call.1} parent=5 // pred_region
        %s253 = ssub.s32 %s21, 1
        // Predicated region
        $region13: #{tpu_custom_call.1} parent=11 // pred_check
          %p254 = pneg %p82
        $region14: #{tpu_custom_call.1} parent=11 // pred_check_branch
          %256 = sbr.rel (%p254) target = $region16
        $region15: #{tpu_custom_call.1} parent=11 // pred_region
          %s258 = ssub.s32 256, 256
          %259 = vsyncadd [#allocation3], %s258
          %s260 = sshll.u32 [#allocation2], 4
          %s261 = int_to_ptr.vmem [resolvable:$true] %s260
          %266 = dma.hbm_to_vmem [thread:$0]  %s1, 256, %s261, [#allocation3], 64, 64, 4
        $region16: #{tpu_custom_call.1} parent=11 // pred_fallthru
          _
        // Predicated region
        $region17: #{tpu_custom_call.1} parent=11 // pred_check
          %p267 = pneg %p103
        $region18: #{tpu_custom_call.1} parent=11 // pred_check_branch
          %269 = sbr.rel (%p267) target = $region20
        $region19: #{tpu_custom_call.1} parent=11 // pred_region
          _
        $region20: #{tpu_custom_call.1} parent=11 // pred_fallthru
          _
      $region12: #{tpu_custom_call.1} parent=5 // pred_fallthru
        _
      %p270 = scmp.lt.s32.totalorder %s21, 4
      // Predicated region
      $region21: #{tpu_custom_call.1} parent=5 // pred_check
        %p271 = pneg %p270
      $region22: #{tpu_custom_call.1} parent=5 // pred_check_branch
        %273 = sbr.rel (%p271) target = $region24
      $region23: #{tpu_custom_call.1} parent=5 // pred_region
        // Predicated region
        $region25: #{tpu_custom_call.1} parent=23 // pred_check
          %p274 = pneg %p55
        $region26: #{tpu_custom_call.1} parent=23 // pred_check_branch
          %276 = sbr.rel (%p274) target = $region28
        $region27: #{tpu_custom_call.1} parent=23 // pred_region
          %s277 = smul.u32 2, %s29
          %p278 = scmp.lt.s32.totalorder %s28, 1
          %s279 = scalar_select %p278, %s28, 1
          %p280 = scmp.lt.s32.totalorder %s277, 3
          %s281 = scalar_select %p280, %s277, 3
          %s282 = smul.addr %s279, 4
          %s283 = sadd.s32 %s281, %s282
          %s284 = smul.addr %s283, 8
          %s285 = scalar_lea.vmem %s0, %s284
          %s286 = smul.u32 2, %s29
        $region28: #{tpu_custom_call.1} parent=23 // pred_fallthru
          _
        // Predicated region
        $region29: #{tpu_custom_call.1} parent=23 // pred_check
          %p287 = pneg %p123
        $region30: #{tpu_custom_call.1} parent=23 // pred_check_branch
          %289 = sbr.rel (%p287) target = $region32
        $region31: #{tpu_custom_call.1} parent=23 // pred_region
          %s290 = smul.u32 2, %s29
          %p291 = scmp.lt.s32.totalorder %s290, 3
          %s292 = scalar_select %p291, %s290, 3
          %s293 = smul.addr %s292, 8
          %s294 = scalar_lea.vmem %s3, %s293
          %s295 = smul.u32 2, %s29
        $region32: #{tpu_custom_call.1} parent=23 // pred_fallthru
          _
        // Predicated region
        $region33: #{tpu_custom_call.1} parent=23 // pred_check
          %p296 = pneg %p149
        $region34: #{tpu_custom_call.1} parent=23 // pred_check_branch
          %298 = sbr.rel (%p296) target = $region36
        $region35: #{tpu_custom_call.1} parent=23 // pred_region
          %s299 = smul.u32 2, %s29
          %p300 = scmp.lt.s32.totalorder %s299, 3
          %s301 = scalar_select %p300, %s299, 3
          %s302 = smul.addr %s301, 8
          %s303 = scalar_lea.vmem %s4, %s302
          %s304 = smul.u32 2, %s29
        $region36: #{tpu_custom_call.1} parent=23 // pred_fallthru
          _
      $region24: #{tpu_custom_call.1} parent=5 // pred_fallthru
        _
      %p305 = scmp.le.s32.totalorder 1, %s21
      %p306 = scmp.lt.s32.totalorder %s21, 5
      %p307 = pnand %p305, %p306
      %p308 = pneg %p307
      // Predicated region
      $region37: #{tpu_custom_call.1} parent=5 // pred_check
        _
      $region38: #{tpu_custom_call.1} parent=5 // pred_check_branch
        %310 = sbr.rel (%p307) target = $region40
      $region39: #{tpu_custom_call.1} parent=5 // pred_region
        %s311 = ssub.s32 %s21, 1
        // Predicated region
        $region41: #{tpu_custom_call.1} parent=39 // pred_check
          %p312 = pneg %p82
        $region42: #{tpu_custom_call.1} parent=39 // pred_check_branch
          %314 = sbr.rel (%p312) target = $region44
        $region43: #{tpu_custom_call.1} parent=39 // pred_region
          %315 = dma.done [#allocation3], 256
        $region44: #{tpu_custom_call.1} parent=39 // pred_fallthru
          _
        %s316 = smul.u32 2, %s31
        %p317 = scmp.lt.s32.totalorder %s30, 1
        %s318 = scalar_select %p317, %s30, 1
        %p319 = scmp.lt.s32.totalorder %s316, 3
        %s320 = scalar_select %p319, %s316, 3
        %s321 = smul.addr %s318, 4
        %s322 = sadd.s32 %s320, %s321
        %s323 = smul.addr %s322, 8
        %s324 = scalar_lea.vmem %s0, %s323
        %p325 = pneg %p61
        %p326 = pneg %p58
        %p327 = pneg %p82
        %p328 = pneg %p79
        %p329 = pneg %p103
        %p330 = pneg %p100
        %s331 = smul.u32 2, %s31
        %p332 = scmp.lt.s32.totalorder %s331, 3
        %s333 = scalar_select %p332, %s331, 3
        %s334 = smul.addr %s333, 8
        %s335 = scalar_lea.vmem %s3, %s334
        %p336 = pneg %p129
        %p337 = pneg %p126
        %s338 = smul.u32 2, %s31
        %p339 = scmp.lt.s32.totalorder %s338, 3
        %s340 = scalar_select %p339, %s338, 3
        %s341 = smul.addr %s340, 8
        %s342 = scalar_lea.vmem %s4, %s341
        %p343 = pneg %p155
        %p344 = pneg %p152
        %p345 = pneg %p183
        %p346 = pneg %p180
        %s347 = sand.u32 %s170, 1
        %s348 = scalar_lea.sflag [#allocation4], %s347
        %s349 = sand.u32 %s170, 1
        %s350 = smul.addr %s349, 8
        %s351 = scalar_lea.vmem [#allocation5], %s350
        %p352 = pneg %p211
        %p353 = pneg %p208
        %s354 = sand.u32 %s26, 1
        %s355 = scalar_lea.sflag [#allocation7], %s354
        %s356 = sand.u32 %s198, 1
        %s357 = smul.addr %s356, 8
        %s358 = scalar_lea.vmem [#allocation6], %s357
        %p359 = pneg %p239
        %p360 = pneg %p236
        %s361 = sand.u32 %s26, 1
        %s362 = scalar_lea.sflag [#allocation7], %s361
        %s363 = sand.u32 %s226, 1
        %s364 = smul.addr %s363, 8
        %s365 = scalar_lea.vmem [#allocation8], %s364
        %s366 = smul.u32 2, %s31
        %p367 = scmp.lt.s32.totalorder %s30, 1
        %s368 = scalar_select %p367, %s30, 1
        %p369 = scmp.lt.s32.totalorder %s366, 3
        %s370 = scalar_select %p369, %s366, 3
        %s371 = smul.addr %s368, 4
        %s372 = sadd.s32 %s370, %s371
        %s373 = smul.addr %s372, 8
        %s374 = scalar_lea.vmem %s0, %s373
        %s375 = smul.u32 2, %s31
        %s376 = smul.u32 2, %s31
        %p377 = scmp.lt.s32.totalorder %s376, 3
        %s378 = scalar_select %p377, %s376, 3
        %s379 = smul.addr %s378, 8
        %s380 = scalar_lea.vmem %s3, %s379
        %s381 = smul.u32 2, %s31
        %s382 = smul.u32 2, %s31
        %p383 = scmp.lt.s32.totalorder %s382, 3
        %s384 = scalar_select %p383, %s382, 3
        %s385 = smul.addr %s384, 8
        %s386 = scalar_lea.vmem %s4, %s385
        %s387 = smul.u32 2, %s31
        %s388 = smul.u32 2, %s31
        %s389 = smul.u32 2, %s31
        %s390 = smul.u32 2, %s31
        %v392 = vld [vmem:[%s374] sm:$0xff]
        %v393 = vld [vmem:[%s374 + $0x8] sm:$0xff]
        %v394 = vpack.c.bf16 %v393, %v392
        %v395 = vld [vmem:[#allocation2] sm:$0xf]
        %v396 = vld [vmem:[#allocation2 + $0x4] sm:$0xf]
        %v397 = vld [vmem:[#allocation2 + $0x8] sm:$0xf]
        %v398 = vld [vmem:[#allocation2 + $0xc] sm:$0xf]
        %v399 = vld [vmem:[%s2] sm:$0x1]
        %v401 = vlaneseq
        %v402 = vshrl.u32 %v401, 7
        %v403 = vsub.s32 0, %v402
        %v404 = vrot.slane %v399, %v403
        %v410 = vunpack.c.l.b16 %v395
        %v411 = vunpack.c.l.b16 %v396
        %v412 = vunpack.c.l.b16 %v397
        %v413 = vunpack.c.l.b16 %v398
        %v414 = vpack.c.b16 %v411, %v410
        %v415 = vpack.c.b16 %v413, %v412
        %vm418 = vcmask 261120
        %v420 = vsel %vm418, %v394, 0
        %422 = vmatprep.subr.bf16.mxu0 0
        %423 = vmatpush1.bf16.msra.mxu0 %v414
        %424 = vmatprep.subr.bf16.mxu0 0
        %425 = vmatpush1.bf16.msra.mxu0 %v415
        %426 = vmatprep.subr.bf16.mxu0 0
        %427 = vmatpush1.bf16.msra.mxu0 0
        %428 = vmatprep.subr.bf16.mxu0 0
        %429 = vmatpush1.bf16.msra.mxu0 0
        %430 = vmatprep.subr.bf16.mxu0 0
        %431 = vmatpush1.bf16.msra.mxu0 0
        %432 = vmatprep.subr.bf16.mxu0 0
        %433 = vmatpush1.bf16.msra.mxu0 0
        %434 = vmatprep.subr.bf16.mxu0 0
        %435 = vmatpush1.bf16.msra.mxu0 0
        %436 = vmatprep.subr.bf16.mxu0 0
        %437 = vmatpush1.bf16.msra.mxu0 0
        %438 = vmatprep.subr.bf16.mxu0 0
        %439 = vmatpush1.bf16.msra.mxu0 0
        %440 = vmatprep.subr.bf16.mxu0 0
        %441 = vmatpush1.bf16.msra.mxu0 0
        %442 = vmatprep.subr.bf16.mxu0 0
        %443 = vmatpush1.bf16.msra.mxu0 0
        %444 = vmatprep.subr.bf16.mxu0 0
        %445 = vmatpush1.bf16.msra.mxu0 0
        %446 = vmatprep.subr.bf16.mxu0 0
        %447 = vmatpush1.bf16.msra.mxu0 0
        %448 = vmatprep.subr.bf16.mxu0 0
        %449 = vmatpush1.bf16.msra.mxu0 0
        %450 = vmatprep.subr.bf16.mxu0 0
        %451 = vmatpush1.bf16.msra.mxu0 0
        %452 = vmatprep.subr.bf16.mxu0 0
        %453 = vmatpush1.bf16.msra.mxu0 0
        %454 = vmatprep.mubr.bf16.mxu0 0
        %455 = vmatmul.mubr.bf16.gmra.mrb[0].mxu0 %v420
        %v456 = vpop.f32.mrb[0].mxu0
        %v457 = vadd.f32 %v404, %v456
        %v458 = vpop.f32.mrb[0].mxu0
        %v459 = vpop.f32.mrb[0].mxu0
        %v460 = vadd.f32 %v404, %v459
        %v461 = vpop.f32.mrb[0].mxu0
        %462 = vdwg.mxu0
        %v463 = vpack.c.bf16 %v460, %v457
        %v465 = vunpack.c.l.b16 %v463
        %v466 = vunpack.c.h.b16 %v463
        %v467 = vpack.c.b16 %v465, %v465
        %v468 = vpack.c.b16 %v466, %v466
        %469 = vrot.lane.b32.xlu0 %v467, 64
        %v470 = vpop.permute.xlu0 %469
        %471 = vrot.lane.b32.xlu0 %v468, 64
        %v472 = vpop.permute.xlu0 %471
        %vm475 = vcmask 257024
        %476 = vst.msk [vmem:[%s365] sm:$0xf] %vm475, %v470
        %477 = vst.msk [vmem:[%s365 + $0x4] sm:$0xf] %vm475, %v472
        %v478 = vld [vmem:[%s380] sm:$0xff]
        %v479 = vld [vmem:[%s380 + $0x8] sm:$0xff]
        %v480 = vld [vmem:[%s386] sm:$0xff]
        %v481 = vld [vmem:[%s386 + $0x8] sm:$0xff]
        %v482 = vmul.f32 %v457, %v478
        %v483 = vmul.f32 %v460, %v479
        %486 = vrot.lane.b32.xlu0 %v480, 4
        %v487 = vpop.permute.xlu0 %486
        %488 = vrot.lane.b32.xlu0 %v481, 4
        %v489 = vpop.permute.xlu0 %488
        %v492 = vmul.f32 %v457, %v487
        %v493 = vmul.f32 %v460, %v489
        %496 = vrot.lane.b32.xlu0 %v492, 124
        %v497 = vpop.permute.xlu0 %496
        %498 = vrot.lane.b32.xlu0 %v493, 124
        %v499 = vpop.permute.xlu0 %498
        %v502 = vsub.f32 %v482, %v497
        %v503 = vsub.f32 %v483, %v499
        %v504 = vpack.c.bf16 %v503, %v502
        %v506 = vunpack.c.l.b16 %v504
        %v507 = vunpack.c.h.b16 %v504
        %v508 = vpack.c.b16 %v506, %v506
        %v509 = vpack.c.b16 %v507, %v507
        %vm512 = vcmask 27648
        %513 = vst.msk [vmem:[%s351] sm:$0xf] %vm512, %v508
        %514 = vst.msk [vmem:[%s351 + $0x4] sm:$0xf] %vm512, %v509
        %517 = vrot.lane.b32.xlu0 %v478, 4
        %v518 = vpop.permute.xlu0 %517
        %519 = vrot.lane.b32.xlu0 %v479, 4
        %v520 = vpop.permute.xlu0 %519
        %v523 = vmul.f32 %v457, %v518
        %v524 = vmul.f32 %v460, %v520
        %v525 = vmul.f32 %v457, %v480
        %v526 = vmul.f32 %v460, %v481
        %529 = vrot.lane.b32.xlu0 %v525, 4
        %v530 = vpop.permute.xlu0 %529
        %531 = vrot.lane.b32.xlu0 %v526, 4
        %v532 = vpop.permute.xlu0 %531
        %v535 = vadd.f32 %v523, %v530
        %v536 = vadd.f32 %v524, %v532
        %v537 = vpack.c.bf16 %v536, %v535
        %v539 = vunpack.c.l.b16 %v537
        %v540 = vunpack.c.h.b16 %v537
        %v541 = vpack.c.b16 %v539, %v539
        %v542 = vpack.c.b16 %v540, %v540
        %vm545 = vcmask 60448
        %546 = vst.msk [vmem:[%s351] sm:$0xf] %vm545, %v541
        %547 = vst.msk [vmem:[%s351 + $0x4] sm:$0xf] %vm545, %v542
        %548 = vrot.lane.b32.xlu0 %v478, 32
        %v549 = vpop.permute.xlu0 %548
        %550 = vrot.lane.b32.xlu0 %v479, 32
        %v551 = vpop.permute.xlu0 %550
        %v554 = vmul.f32 %v457, %v549
        %v555 = vmul.f32 %v460, %v551
        %556 = vrot.lane.b32.xlu0 %v480, 36
        %v557 = vpop.permute.xlu0 %556
        %558 = vrot.lane.b32.xlu0 %v481, 36
        %v559 = vpop.permute.xlu0 %558
        %v562 = vmul.f32 %v457, %v557
        %v563 = vmul.f32 %v460, %v559
        %566 = vrot.lane.b32.xlu0 %v562, 124
        %v567 = vpop.permute.xlu0 %566
        %568 = vrot.lane.b32.xlu0 %v563, 124
        %v569 = vpop.permute.xlu0 %568
        %v572 = vsub.f32 %v554, %v567
        %v573 = vsub.f32 %v555, %v569
        %v574 = vpack.c.bf16 %v573, %v572
        %v576 = vunpack.c.l.b16 %v574
        %v577 = vunpack.c.h.b16 %v574
        %v578 = vpack.c.b16 %v576, %v576
        %v579 = vpack.c.b16 %v577, %v577
        %580 = vrot.lane.b32.xlu0 %v578, 96
        %v581 = vpop.permute.xlu0 %580
        %582 = vrot.lane.b32.xlu0 %v579, 96
        %v583 = vpop.permute.xlu0 %582
        %586 = vst.msk [vmem:[%s358] sm:$0xf] %vm512, %v581
        %587 = vst.msk [vmem:[%s358 + $0x4] sm:$0xf] %vm512, %v583
        %588 = vrot.lane.b32.xlu0 %v478, 36
        %v589 = vpop.permute.xlu0 %588
        %590 = vrot.lane.b32.xlu0 %v479, 36
        %v591 = vpop.permute.xlu0 %590
        %v594 = vmul.f32 %v457, %v589
        %v595 = vmul.f32 %v460, %v591
        %596 = vrot.lane.b32.xlu0 %v480, 32
        %v597 = vpop.permute.xlu0 %596
        %598 = vrot.lane.b32.xlu0 %v481, 32
        %v599 = vpop.permute.xlu0 %598
        %v602 = vmul.f32 %v457, %v597
        %v603 = vmul.f32 %v460, %v599
        %606 = vrot.lane.b32.xlu0 %v602, 4
        %v607 = vpop.permute.xlu0 %606
        %608 = vrot.lane.b32.xlu0 %v603, 4
        %v609 = vpop.permute.xlu0 %608
        %v612 = vadd.f32 %v594, %v607
        %v613 = vadd.f32 %v595, %v609
        %v614 = vpack.c.bf16 %v613, %v612
        %v616 = vunpack.c.l.b16 %v614
        %v617 = vunpack.c.h.b16 %v614
        %v618 = vpack.c.b16 %v616, %v616
        %v619 = vpack.c.b16 %v617, %v617
        %620 = vrot.lane.b32.xlu0 %v618, 96
        %v621 = vpop.permute.xlu0 %620
        %622 = vrot.lane.b32.xlu0 %v619, 96
        %v623 = vpop.permute.xlu0 %622
        %626 = vst.msk [vmem:[%s358] sm:$0xf] %vm545, %v621
        %627 = vst.msk [vmem:[%s358 + $0x4] sm:$0xf] %vm545, %v623
        %628 = vrot.lane.b32.xlu0 %v478, 8
        %v629 = vpop.permute.xlu0 %628
        %630 = vrot.lane.b32.xlu0 %v479, 8
        %v631 = vpop.permute.xlu0 %630
        %v634 = vmul.f32 %v457, %v629
        %v635 = vmul.f32 %v460, %v631
        %636 = vrot.lane.b32.xlu0 %v480, 12
        %v637 = vpop.permute.xlu0 %636
        %638 = vrot.lane.b32.xlu0 %v481, 12
        %v639 = vpop.permute.xlu0 %638
        %v642 = vmul.f32 %v457, %v637
        %v643 = vmul.f32 %v460, %v639
        %646 = vrot.lane.b32.xlu0 %v642, 124
        %v647 = vpop.permute.xlu0 %646
        %648 = vrot.lane.b32.xlu0 %v643, 124
        %v649 = vpop.permute.xlu0 %648
        %v652 = vsub.f32 %v634, %v647
        %v653 = vsub.f32 %v635, %v649
        %v654 = vpack.c.bf16 %v653, %v652
        %v656 = vunpack.c.l.b16 %v654
        %v657 = vunpack.c.h.b16 %v654
        %v658 = vpack.c.b16 %v656, %v656
        %v659 = vpack.c.b16 %v657, %v657
        %vm662 = vcmask 93248
        %663 = vst.msk [vmem:[%s351] sm:$0xf] %vm662, %v658
        %664 = vst.msk [vmem:[%s351 + $0x4] sm:$0xf] %vm662, %v659
        %665 = vrot.lane.b32.xlu0 %v478, 12
        %v666 = vpop.permute.xlu0 %665
        %667 = vrot.lane.b32.xlu0 %v479, 12
        %v668 = vpop.permute.xlu0 %667
        %v671 = vmul.f32 %v457, %v666
        %v672 = vmul.f32 %v460, %v668
        %673 = vrot.lane.b32.xlu0 %v480, 8
        %v674 = vpop.permute.xlu0 %673
        %675 = vrot.lane.b32.xlu0 %v481, 8
        %v676 = vpop.permute.xlu0 %675
        %v679 = vmul.f32 %v457, %v674
        %v680 = vmul.f32 %v460, %v676
        %683 = vrot.lane.b32.xlu0 %v679, 4
        %v684 = vpop.permute.xlu0 %683
        %685 = vrot.lane.b32.xlu0 %v680, 4
        %v686 = vpop.permute.xlu0 %685
        %v689 = vadd.f32 %v671, %v684
        %v690 = vadd.f32 %v672, %v686
        %v691 = vpack.c.bf16 %v690, %v689
        %v693 = vunpack.c.l.b16 %v691
        %v694 = vunpack.c.h.b16 %v691
        %v695 = vpack.c.b16 %v693, %v693
        %v696 = vpack.c.b16 %v694, %v694
        %vm699 = vcmask 126048
        %700 = vst.msk [vmem:[%s351] sm:$0xf] %vm699, %v695
        %701 = vst.msk [vmem:[%s351 + $0x4] sm:$0xf] %vm699, %v696
        %702 = vrot.lane.b32.xlu0 %v478, 40
        %v703 = vpop.permute.xlu0 %702
        %704 = vrot.lane.b32.xlu0 %v479, 40
        %v705 = vpop.permute.xlu0 %704
        %v708 = vmul.f32 %v457, %v703
        %v709 = vmul.f32 %v460, %v705
        %710 = vrot.lane.b32.xlu0 %v480, 44
        %v711 = vpop.permute.xlu0 %710
        %712 = vrot.lane.b32.xlu0 %v481, 44
        %v713 = vpop.permute.xlu0 %712
        %v716 = vmul.f32 %v457, %v711
        %v717 = vmul.f32 %v460, %v713
        %720 = vrot.lane.b32.xlu0 %v716, 124
        %v721 = vpop.permute.xlu0 %720
        %722 = vrot.lane.b32.xlu0 %v717, 124
        %v723 = vpop.permute.xlu0 %722
        %v726 = vsub.f32 %v708, %v721
        %v727 = vsub.f32 %v709, %v723
        %v728 = vpack.c.bf16 %v727, %v726
        %v730 = vunpack.c.l.b16 %v728
        %v731 = vunpack.c.h.b16 %v728
        %v732 = vpack.c.b16 %v730, %v730
        %v733 = vpack.c.b16 %v731, %v731
        %734 = vrot.lane.b32.xlu0 %v732, 96
        %v735 = vpop.permute.xlu0 %734
        %736 = vrot.lane.b32.xlu0 %v733, 96
        %v737 = vpop.permute.xlu0 %736
        %740 = vst.msk [vmem:[%s358] sm:$0xf] %vm662, %v735
        %741 = vst.msk [vmem:[%s358 + $0x4] sm:$0xf] %vm662, %v737
        %742 = vrot.lane.b32.xlu0 %v478, 44
        %v743 = vpop.permute.xlu0 %742
        %744 = vrot.lane.b32.xlu0 %v479, 44
        %v745 = vpop.permute.xlu0 %744
        %v748 = vmul.f32 %v457, %v743
        %v749 = vmul.f32 %v460, %v745
        %750 = vrot.lane.b32.xlu0 %v480, 40
        %v751 = vpop.permute.xlu0 %750
        %752 = vrot.lane.b32.xlu0 %v481, 40
        %v753 = vpop.permute.xlu0 %752
        %v756 = vmul.f32 %v457, %v751
        %v757 = vmul.f32 %v460, %v753
        %760 = vrot.lane.b32.xlu0 %v756, 4
        %v761 = vpop.permute.xlu0 %760
        %762 = vrot.lane.b32.xlu0 %v757, 4
        %v763 = vpop.permute.xlu0 %762
        %v766 = vadd.f32 %v748, %v761
        %v767 = vadd.f32 %v749, %v763
        %v768 = vpack.c.bf16 %v767, %v766
        %v770 = vunpack.c.l.b16 %v768
        %v771 = vunpack.c.h.b16 %v768
        %v772 = vpack.c.b16 %v770, %v770
        %v773 = vpack.c.b16 %v771, %v771
        %774 = vrot.lane.b32.xlu0 %v772, 96
        %v775 = vpop.permute.xlu0 %774
        %776 = vrot.lane.b32.xlu0 %v773, 96
        %v777 = vpop.permute.xlu0 %776
        %780 = vst.msk [vmem:[%s358] sm:$0xf] %vm699, %v775
        %781 = vst.msk [vmem:[%s358 + $0x4] sm:$0xf] %vm699, %v777
        %782 = vrot.lane.b32.xlu0 %v478, 16
        %v783 = vpop.permute.xlu0 %782
        %784 = vrot.lane.b32.xlu0 %v479, 16
        %v785 = vpop.permute.xlu0 %784
        %v788 = vmul.f32 %v457, %v783
        %v789 = vmul.f32 %v460, %v785
        %790 = vrot.lane.b32.xlu0 %v480, 20
        %v791 = vpop.permute.xlu0 %790
        %792 = vrot.lane.b32.xlu0 %v481, 20
        %v793 = vpop.permute.xlu0 %792
        %v796 = vmul.f32 %v457, %v791
        %v797 = vmul.f32 %v460, %v793
        %800 = vrot.lane.b32.xlu0 %v796, 124
        %v801 = vpop.permute.xlu0 %800
        %802 = vrot.lane.b32.xlu0 %v797, 124
        %v803 = vpop.permute.xlu0 %802
        %v806 = vsub.f32 %v788, %v801
        %v807 = vsub.f32 %v789, %v803
        %v808 = vpack.c.bf16 %v807, %v806
        %v810 = vunpack.c.l.b16 %v808
        %v811 = vunpack.c.h.b16 %v808
        %v812 = vpack.c.b16 %v810, %v810
        %v813 = vpack.c.b16 %v811, %v811
        %vm816 = vcmask 158848
        %817 = vst.msk [vmem:[%s351] sm:$0xf] %vm816, %v812
        %818 = vst.msk [vmem:[%s351 + $0x4] sm:$0xf] %vm816, %v813
        %819 = vrot.lane.b32.xlu0 %v478, 20
        %v820 = vpop.permute.xlu0 %819
        %821 = vrot.lane.b32.xlu0 %v479, 20
        %v822 = vpop.permute.xlu0 %821
        %v825 = vmul.f32 %v457, %v820
        %v826 = vmul.f32 %v460, %v822
        %827 = vrot.lane.b32.xlu0 %v480, 16
        %v828 = vpop.permute.xlu0 %827
        %829 = vrot.lane.b32.xlu0 %v481, 16
        %v830 = vpop.permute.xlu0 %829
        %v833 = vmul.f32 %v457, %v828
        %v834 = vmul.f32 %v460, %v830
        %837 = vrot.lane.b32.xlu0 %v833, 4
        %v838 = vpop.permute.xlu0 %837
        %839 = vrot.lane.b32.xlu0 %v834, 4
        %v840 = vpop.permute.xlu0 %839
        %v843 = vadd.f32 %v825, %v838
        %v844 = vadd.f32 %v826, %v840
        %v845 = vpack.c.bf16 %v844, %v843
        %v847 = vunpack.c.l.b16 %v845
        %v848 = vunpack.c.h.b16 %v845
        %v849 = vpack.c.b16 %v847, %v847
        %v850 = vpack.c.b16 %v848, %v848
        %vm853 = vcmask 191648
        %854 = vst.msk [vmem:[%s351] sm:$0xf] %vm853, %v849
        %855 = vst.msk [vmem:[%s351 + $0x4] sm:$0xf] %vm853, %v850
        %856 = vrot.lane.b32.xlu0 %v478, 48
        %v857 = vpop.permute.xlu0 %856
        %858 = vrot.lane.b32.xlu0 %v479, 48
        %v859 = vpop.permute.xlu0 %858
        %v862 = vmul.f32 %v457, %v857
        %v863 = vmul.f32 %v460, %v859
        %864 = vrot.lane.b32.xlu0 %v480, 52
        %v865 = vpop.permute.xlu0 %864
        %866 = vrot.lane.b32.xlu0 %v481, 52
        %v867 = vpop.permute.xlu0 %866
        %v870 = vmul.f32 %v457, %v865
        %v871 = vmul.f32 %v460, %v867
        %874 = vrot.lane.b32.xlu0 %v870, 124
        %v875 = vpop.permute.xlu0 %874
        %876 = vrot.lane.b32.xlu0 %v871, 124
        %v877 = vpop.permute.xlu0 %876
        %v880 = vsub.f32 %v862, %v875
        %v881 = vsub.f32 %v863, %v877
        %v882 = vpack.c.bf16 %v881, %v880
        %v884 = vunpack.c.l.b16 %v882
        %v885 = vunpack.c.h.b16 %v882
        %v886 = vpack.c.b16 %v884, %v884
        %v887 = vpack.c.b16 %v885, %v885
        %888 = vrot.lane.b32.xlu0 %v886, 96
        %v889 = vpop.permute.xlu0 %888
        %890 = vrot.lane.b32.xlu0 %v887, 96
        %v891 = vpop.permute.xlu0 %890
        %894 = vst.msk [vmem:[%s358] sm:$0xf] %vm816, %v889
        %895 = vst.msk [vmem:[%s358 + $0x4] sm:$0xf] %vm816, %v891
        %896 = vrot.lane.b32.xlu0 %v478, 52
        %v897 = vpop.permute.xlu0 %896
        %898 = vrot.lane.b32.xlu0 %v479, 52
        %v899 = vpop.permute.xlu0 %898
        %v902 = vmul.f32 %v457, %v897
        %v903 = vmul.f32 %v460, %v899
        %904 = vrot.lane.b32.xlu0 %v480, 48
        %v905 = vpop.permute.xlu0 %904
        %906 = vrot.lane.b32.xlu0 %v481, 48
        %v907 = vpop.permute.xlu0 %906
        %v910 = vmul.f32 %v457, %v905
        %v911 = vmul.f32 %v460, %v907
        %914 = vrot.lane.b32.xlu0 %v910, 4
        %v915 = vpop.permute.xlu0 %914
        %916 = vrot.lane.b32.xlu0 %v911, 4
        %v917 = vpop.permute.xlu0 %916
        %v920 = vadd.f32 %v902, %v915
        %v921 = vadd.f32 %v903, %v917
        %v922 = vpack.c.bf16 %v921, %v920
        %v924 = vunpack.c.l.b16 %v922
        %v925 = vunpack.c.h.b16 %v922
        %v926 = vpack.c.b16 %v924, %v924
        %v927 = vpack.c.b16 %v925, %v925
        %928 = vrot.lane.b32.xlu0 %v926, 96
        %v929 = vpop.permute.xlu0 %928
        %930 = vrot.lane.b32.xlu0 %v927, 96
        %v931 = vpop.permute.xlu0 %930
        %934 = vst.msk [vmem:[%s358] sm:$0xf] %vm853, %v929
        %935 = vst.msk [vmem:[%s358 + $0x4] sm:$0xf] %vm853, %v931
        %936 = vrot.lane.b32.xlu0 %v478, 24
        %v937 = vpop.permute.xlu0 %936
        %938 = vrot.lane.b32.xlu0 %v479, 24
        %v939 = vpop.permute.xlu0 %938
        %v942 = vmul.f32 %v457, %v937
        %v943 = vmul.f32 %v460, %v939
        %944 = vrot.lane.b32.xlu0 %v480, 28
        %v945 = vpop.permute.xlu0 %944
        %946 = vrot.lane.b32.xlu0 %v481, 28
        %v947 = vpop.permute.xlu0 %946
        %v950 = vmul.f32 %v457, %v945
        %v951 = vmul.f32 %v460, %v947
        %954 = vrot.lane.b32.xlu0 %v950, 124
        %v955 = vpop.permute.xlu0 %954
        %956 = vrot.lane.b32.xlu0 %v951, 124
        %v957 = vpop.permute.xlu0 %956
        %v960 = vsub.f32 %v942, %v955
        %v961 = vsub.f32 %v943, %v957
        %v962 = vpack.c.bf16 %v961, %v960
        %v964 = vunpack.c.l.b16 %v962
        %v965 = vunpack.c.h.b16 %v962
        %v966 = vpack.c.b16 %v964, %v964
        %v967 = vpack.c.b16 %v965, %v965
        %vm970 = vcmask 224448
        %971 = vst.msk [vmem:[%s351] sm:$0xf] %vm970, %v966
        %972 = vst.msk [vmem:[%s351 + $0x4] sm:$0xf] %vm970, %v967
        %973 = vrot.lane.b32.xlu0 %v478, 28
        %v974 = vpop.permute.xlu0 %973
        %975 = vrot.lane.b32.xlu0 %v479, 28
        %v976 = vpop.permute.xlu0 %975
        %v979 = vmul.f32 %v457, %v974
        %v980 = vmul.f32 %v460, %v976
        %981 = vrot.lane.b32.xlu0 %v480, 24
        %v982 = vpop.permute.xlu0 %981
        %983 = vrot.lane.b32.xlu0 %v481, 24
        %v984 = vpop.permute.xlu0 %983
        %v987 = vmul.f32 %v457, %v982
        %v988 = vmul.f32 %v460, %v984
        %991 = vrot.lane.b32.xlu0 %v987, 4
        %v992 = vpop.permute.xlu0 %991
        %993 = vrot.lane.b32.xlu0 %v988, 4
        %v994 = vpop.permute.xlu0 %993
        %v997 = vadd.f32 %v979, %v992
        %v998 = vadd.f32 %v980, %v994
        %v999 = vpack.c.bf16 %v998, %v997
        %v1001 = vunpack.c.l.b16 %v999
        %v1002 = vunpack.c.h.b16 %v999
        %v1003 = vpack.c.b16 %v1001, %v1001
        %v1004 = vpack.c.b16 %v1002, %v1002
        %vm1007 = vcmask 257248
        %1008 = vst.msk [vmem:[%s351] sm:$0xf] %vm1007, %v1003
        %1009 = vst.msk [vmem:[%s351 + $0x4] sm:$0xf] %vm1007, %v1004
        %1010 = vrot.lane.b32.xlu0 %v478, 56
        %v1011 = vpop.permute.xlu0 %1010
        %1012 = vrot.lane.b32.xlu0 %v479, 56
        %v1013 = vpop.permute.xlu0 %1012
        %v1016 = vmul.f32 %v457, %v1011
        %v1017 = vmul.f32 %v460, %v1013
        %1018 = vrot.lane.b32.xlu0 %v480, 60
        %v1019 = vpop.permute.xlu0 %1018
        %1020 = vrot.lane.b32.xlu0 %v481, 60
        %v1021 = vpop.permute.xlu0 %1020
        %v1024 = vmul.f32 %v457, %v1019
        %v1025 = vmul.f32 %v460, %v1021
        %1028 = vrot.lane.b32.xlu0 %v1024, 124
        %v1029 = vpop.permute.xlu0 %1028
        %1030 = vrot.lane.b32.xlu0 %v1025, 124
        %v1031 = vpop.permute.xlu0 %1030
        %v1034 = vsub.f32 %v1016, %v1029
        %v1035 = vsub.f32 %v1017, %v1031
        %v1036 = vpack.c.bf16 %v1035, %v1034
        %v1038 = vunpack.c.l.b16 %v1036
        %v1039 = vunpack.c.h.b16 %v1036
        %v1040 = vpack.c.b16 %v1038, %v1038
        %v1041 = vpack.c.b16 %v1039, %v1039
        %1042 = vrot.lane.b32.xlu0 %v1040, 96
        %v1043 = vpop.permute.xlu0 %1042
        %1044 = vrot.lane.b32.xlu0 %v1041, 96
        %v1045 = vpop.permute.xlu0 %1044
        %1048 = vst.msk [vmem:[%s358] sm:$0xf] %vm970, %v1043
        %1049 = vst.msk [vmem:[%s358 + $0x4] sm:$0xf] %vm970, %v1045
        %1050 = vrot.lane.b32.xlu0 %v478, 60
        %v1051 = vpop.permute.xlu0 %1050
        %1052 = vrot.lane.b32.xlu0 %v479, 60
        %v1053 = vpop.permute.xlu0 %1052
        %v1056 = vmul.f32 %v457, %v1051
        %v1057 = vmul.f32 %v460, %v1053
        %1058 = vrot.lane.b32.xlu0 %v480, 56
        %v1059 = vpop.permute.xlu0 %1058
        %1060 = vrot.lane.b32.xlu0 %v481, 56
        %v1061 = vpop.permute.xlu0 %1060
        %v1064 = vmul.f32 %v457, %v1059
        %v1065 = vmul.f32 %v460, %v1061
        %1068 = vrot.lane.b32.xlu0 %v1064, 4
        %v1069 = vpop.permute.xlu0 %1068
        %1070 = vrot.lane.b32.xlu0 %v1065, 4
        %v1071 = vpop.permute.xlu0 %1070
        %v1074 = vadd.f32 %v1056, %v1069
        %v1075 = vadd.f32 %v1057, %v1071
        %v1076 = vpack.c.bf16 %v1075, %v1074
        %v1078 = vunpack.c.l.b16 %v1076
        %v1079 = vunpack.c.h.b16 %v1076
        %v1080 = vpack.c.b16 %v1078, %v1078
        %v1081 = vpack.c.b16 %v1079, %v1079
        %1082 = vrot.lane.b32.xlu0 %v1080, 96
        %v1083 = vpop.permute.xlu0 %1082
        %1084 = vrot.lane.b32.xlu0 %v1081, 96
        %v1085 = vpop.permute.xlu0 %1084
        %1088 = vst.msk [vmem:[%s358] sm:$0xf] %vm1007, %v1083
        %1089 = vst.msk [vmem:[%s358 + $0x4] sm:$0xf] %vm1007, %v1085
        %s1090 = sand.u32 %s170, 1
        %s1091 = scalar_lea.sflag [#allocation4], %s1090
        %s1092 = sand.u32 %s170, 1
        %s1093 = smul.addr %s1092, 8
        %s1094 = scalar_lea.vmem [#allocation5], %s1093
        %s1095 = sand.u32 %s26, 1
        %s1096 = scalar_lea.sflag [#allocation7], %s1095
        %s1097 = sand.u32 %s198, 1
        %s1098 = smul.addr %s1097, 8
        %s1099 = scalar_lea.vmem [#allocation6], %s1098
        %s1100 = sand.u32 %s26, 1
        %s1101 = scalar_lea.sflag [#allocation7], %s1100
        %s1102 = sand.u32 %s226, 1
        %s1103 = smul.addr %s1102, 8
        %s1104 = scalar_lea.vmem [#allocation8], %s1103
        // Predicated region
        $region45: #{tpu_custom_call.1} parent=39 // pred_check
          %p1105 = pneg %p180
        $region46: #{tpu_custom_call.1} parent=39 // pred_check_branch
          %1107 = sbr.rel (%p1105) target = $region48
        $region47: #{tpu_custom_call.1} parent=39 // pred_region
          %s1108 = smul.u32 2, %s31
          %s1110 = ssub.s32 128, 128
          %1111 = vsyncadd %s1091, %s1110
          %s1112 = smul.addr %s30, 4
          %s1113 = sadd.s32 %s1108, %s1112
          %s1114 = smul.addr %s1113, 64
          %s1115 = scalar_lea.hbm %s5, %s1114
          %s1116 = sshll.u32 %s1094, 4
          %s1117 = int_to_ptr.vmem [resolvable:$true] %s1116
          %1122 = dma.vmem_to_hbm [thread:$0]  %s1117, 128, %s1115, %s1091, 64, 64, 4
        $region48: #{tpu_custom_call.1} parent=39 // pred_fallthru
          _
        // Predicated region
        $region49: #{tpu_custom_call.1} parent=39 // pred_check
          %p1123 = pneg %p208
        $region50: #{tpu_custom_call.1} parent=39 // pred_check_branch
          %1125 = sbr.rel (%p1123) target = $region52
        $region51: #{tpu_custom_call.1} parent=39 // pred_region
          %s1126 = smul.u32 2, %s31
          %s1128 = ssub.s32 128, 128
          %1129 = vsyncadd %s1096, %s1128
          %s1130 = smul.addr %s30, 4
          %s1131 = sadd.s32 %s1126, %s1130
          %s1132 = smul.addr %s1131, 64
          %s1133 = scalar_lea.hbm %s6, %s1132
          %s1134 = sshll.u32 %s1099, 4
          %s1135 = int_to_ptr.vmem [resolvable:$true] %s1134
          %1140 = dma.vmem_to_hbm [thread:$0]  %s1135, 128, %s1133, %s1096, 64, 64, 4
        $region52: #{tpu_custom_call.1} parent=39 // pred_fallthru
          _
        // Predicated region
        $region53: #{tpu_custom_call.1} parent=39 // pred_check
          %p1141 = pneg %p236
        $region54: #{tpu_custom_call.1} parent=39 // pred_check_branch
          %1143 = sbr.rel (%p1141) target = $region56
        $region55: #{tpu_custom_call.1} parent=39 // pred_region
          %s1144 = smul.u32 2, %s31
          %s1146 = ssub.s32 128, 128
          %1147 = vsyncadd %s1101, %s1146
          %s1148 = smul.addr %s30, 4
          %s1149 = sadd.s32 %s1144, %s1148
          %s1150 = smul.addr %s1149, 64
          %s1151 = scalar_lea.hbm %s7, %s1150
          %s1152 = sshll.u32 %s1104, 4
          %s1153 = int_to_ptr.vmem [resolvable:$true] %s1152
          %1158 = dma.vmem_to_hbm [thread:$0]  %s1153, 128, %s1151, %s1101, 64, 64, 4
        $region56: #{tpu_custom_call.1} parent=39 // pred_fallthru
          _
      $region40: #{tpu_custom_call.1} parent=5 // pred_fallthru
        _
      %p1159 = scmp.le.s32.totalorder 2, %s21
      // Predicated region
      $region57: #{tpu_custom_call.1} parent=5 // pred_check
        %p1160 = pneg %p1159
      $region58: #{tpu_custom_call.1} parent=5 // pred_check_branch
        %1162 = sbr.rel (%p1160) target = $region60
      $region59: #{tpu_custom_call.1} parent=5 // pred_region
        %s1163 = ssub.s32 %s21, 2
        // Predicated region
        $region61: #{tpu_custom_call.1} parent=59 // pred_check
          %p1164 = pneg %p186
        $region62: #{tpu_custom_call.1} parent=59 // pred_check_branch
          %1166 = sbr.rel (%p1164) target = $region64
        $region63: #{tpu_custom_call.1} parent=59 // pred_region
          %s1167 = sand.u32 %s171, 1
          %s1168 = scalar_lea.sflag [#allocation4], %s1167
          %s1169 = sand.u32 %s171, 1
          %s1170 = smul.addr %s1169, 8
          %s1171 = scalar_lea.vmem [#allocation5], %s1170
          %1172 = dma.done %s1168, 128
        $region64: #{tpu_custom_call.1} parent=59 // pred_fallthru
          _
        // Predicated region
        $region65: #{tpu_custom_call.1} parent=59 // pred_check
          %p1173 = pneg %p214
        $region66: #{tpu_custom_call.1} parent=59 // pred_check_branch
          %1175 = sbr.rel (%p1173) target = $region68
        $region67: #{tpu_custom_call.1} parent=59 // pred_region
          %s1176 = sand.u32 %s27, 1
          %s1177 = scalar_lea.sflag [#allocation7], %s1176
          %s1178 = sand.u32 %s199, 1
          %s1179 = smul.addr %s1178, 8
          %s1180 = scalar_lea.vmem [#allocation6], %s1179
          %1181 = dma.done %s1177, 128
        $region68: #{tpu_custom_call.1} parent=59 // pred_fallthru
          _
        // Predicated region
        $region69: #{tpu_custom_call.1} parent=59 // pred_check
          %p1182 = pneg %p242
        $region70: #{tpu_custom_call.1} parent=59 // pred_check_branch
          %1184 = sbr.rel (%p1182) target = $region72
        $region71: #{tpu_custom_call.1} parent=59 // pred_region
          %s1185 = sand.u32 %s27, 1
          %s1186 = scalar_lea.sflag [#allocation7], %s1185
          %s1187 = sand.u32 %s227, 1
          %s1188 = smul.addr %s1187, 8
          %s1189 = scalar_lea.vmem [#allocation8], %s1188
          %1190 = dma.done %s1186, 128
        $region72: #{tpu_custom_call.1} parent=59 // pred_fallthru
          _
      $region60: #{tpu_custom_call.1} parent=5 // pred_fallthru
        _
    $region6: #{tpu_custom_call.1} parent=1 // loop_footer
      %s25 = sadd.s32 1, %s21
    $region7: #{tpu_custom_call.1} parent=1 // loop_footer_branch
      %20 = sbr.rel target = $region3
    $region8: #{tpu_custom_call.1} parent=1 // loop_exit
      _
    %1191 = vsyncpa [#allocation3], 1
    %s1192 = scalar_lea.sflag [#allocation3], 1
    %1193 = vsyncpa %s1192, 1
    %1194 = vsyncpa [#allocation4], 1
    %s1195 = scalar_lea.sflag [#allocation4], 1
    %1196 = vsyncpa %s1195, 1
    %1197 = vsyncpa [#allocation7], 1
    %s1198 = scalar_lea.sflag [#allocation7], 1
    %1199 = vsyncpa %s1198, 1

</llo_original>
